<compile_context>
chip_gen: v6e
topology: v6e:2x2x1
jax: 0.10.0
libtpu: 0.0.40
codegen_flags: <defaults>
</compile_context>

<pallas_src>
import functools

import jax
import jax.numpy as jnp
from jax import lax
from jax.experimental import pallas as pl
from jax.experimental.pallas import tpu as pltpu

_TM_PREF, _TN_PREF, _TK_PREF = 512, 256, 1024


def _round_up(v, m):
    return ((v + m - 1) // m) * m


def _device_kind():
    try:
        return jax.devices()[0].device_kind.lower()
    except Exception:
        return ""


def _is_v7x():
    return "v7" in _device_kind()


def _vmem_budget_bytes():
    # v7x: 64 MiB per TensorCore -> leave ~15% headroom for Mosaic internal
    # scratch / semaphores.  v5e / v6e: 128 MiB physical VMEM (only the scoped
    # *default* is small, and we override it explicitly) -> ~100 MiB budget.
    if _is_v7x():
        return int(0.85 * 64 * 1024 * 1024)
    return 100 * 1024 * 1024


def _pick_tile(dim, pref):
    """Largest tile <= pref dividing dim; dim is a multiple of 128, result is
    either dim itself or a multiple of 128 (lane-legal)."""
    if dim <= pref:
        return dim
    t = pref
    while t > 128 and dim % t != 0:
        t //= 2
    return t


def _pad_for_tile(dim, pref, waste_cap=1.30):
    """Pad `dim` so a large tile divides it instead of silently degrading to
    128-tiles on awkward sizes (384, 640, ...).  Zero rows/cols of A and H are
    harmless to the result.  Returns (padded_dim, tile)."""
    base = _round_up(max(dim, 128), 128)
    if base <= pref:
        return base, base
    t = pref
    while t > 128:
        padded = _round_up(base, t)
        if padded <= waste_cap * base:
            return padded, t
        t //= 2
    return base, 128


def _cap_tm_for_cores(tm, m_pad):
    """v7x has 2 TensorCores: make sure the 'parallel' row axis has >= 2 blocks."""
    if _is_v7x() and m_pad // tm < 2 and m_pad >= 256:
        return m_pad // 2      # divides m_pad, multiple of 64 -> sublane-legal
    return tm


# ---------------------------------------------------------------------------
# Kernel 1 (per layer): feature transform  H = X @ W   (hoisted, run ONCE)
# ---------------------------------------------------------------------------
def _matmul_kernel(x_ref, w_ref, o_ref, acc_ref):
    k = pl.program_id(2)

    @pl.when(k == 0)
    def _():
        acc_ref[...] = jnp.zeros_like(acc_ref)

    acc_ref[...] += jnp.dot(x_ref[...], w_ref[...],
                            preferred_element_type=jnp.float32)

    @pl.when(k == pl.num_programs(2) - 1)
    def _():
        o_ref[...] = acc_ref[...].astype(o_ref.dtype)


def _matmul_pallas(x, w, out_dtype):
    m, kd = x.shape
    _, nd = w.shape
    budget = _vmem_budget_bytes()
    out_isz = jnp.dtype(out_dtype).itemsize

    tm = _cap_tm_for_cores(_pick_tile(m, _TM_PREF), m)
    tn = _pick_tile(nd, _TN_PREF)
    tk = _pick_tile(kd, _TK_PREF)

    def footprint(tm_, tn_, tk_):
        return (2 * (tm_ * tk_ * 2 + tk_ * tn_ * 2)
                + 2 * tm_ * tn_ * out_isz + tm_ * tn_ * 4)

    cap = 0.9 * budget
    while footprint(tm, tn, tk) > cap and tk >= 256 and (tk // 2) % 128 == 0:
        tk //= 2
    while footprint(tm, tn, tk) > cap and tm >= 256 and (tm // 2) % 8 == 0:
        tm //= 2

    grid = (m // tm, nd // tn, kd // tk)
    est = footprint(tm, tn, tk)
    vmem_limit = int(min(max(2 * est, 32 * 1024 * 1024), budget))

    flops = 2 * m * kd * nd
    bytes_accessed = (grid[1] * m * kd * 2      # X re-streamed per column tile
                      + grid[0] * kd * nd * 2   # W re-streamed per row tile
                      + m * nd * out_isz)

    return pl.pallas_call(
        _matmul_kernel,
        out_shape=jax.ShapeDtypeStruct((m, nd), out_dtype),
        grid_spec=pltpu.PrefetchScalarGridSpec(
            num_scalar_prefetch=0,
            grid=grid,
            in_specs=[
                pl.BlockSpec((tm, tk), lambda i, j, k: (i, k)),  # X (bf16)
                pl.BlockSpec((tk, tn), lambda i, j, k: (k, j)),  # W (bf16)
            ],
            out_specs=pl.BlockSpec((tm, tn), lambda i, j, k: (i, j)),
            scratch_shapes=[pltpu.VMEM((tm, tn), jnp.float32)],
        ),
        compiler_params=pltpu.CompilerParams(
            dimension_semantics=("parallel", "parallel", "arbitrary"),
            vmem_limit_bytes=vmem_limit,
        ),
        cost_estimate=pl.CostEstimate(flops=int(flops), transcendentals=0,
                                      bytes_accessed=int(bytes_accessed)),
    )(x, w)


# ---------------------------------------------------------------------------
# Kernel 2 (per layer): aggregation  Y = A_norm @ H + b
# ---------------------------------------------------------------------------
def _agg_kernel(a_ref, h_ref, b_ref, o_ref, acc_ref, *, tk, h_resident):
    k = pl.program_id(2)

    @pl.when(k == 0)
    def _():
        acc_ref[...] = jnp.zeros_like(acc_ref)

    if h_resident:
        # H column slab is fully VMEM-resident; slice the k-th row block.
        start = pl.multiple_of(k * tk, 128)
        h_tile = h_ref[pl.ds(start, tk), :]
    else:
        h_tile = h_ref[...]

    acc_ref[...] += jnp.dot(a_ref[...], h_tile,
                            preferred_element_type=jnp.float32)

    @pl.when(k == pl.num_programs(2) - 1)
    def _():
        # NOTE: padded rows (i >= num_nodes) also get the bias; harmless because
        # padded columns of A are zero and the final slice drops padded rows.
        o_ref[...] = (acc_ref[...] + b_ref[...]).astype(o_ref.dtype)


def _agg_pallas(a_bf16, h_bf16, b_f32, out_dtype):
    n_pad = a_bf16.shape[0]
    f_out_pad = h_bf16.shape[1]
    budget = _vmem_budget_bytes()
    out_isz = jnp.dtype(out_dtype).itemsize

    tm = _cap_tm_for_cores(_pick_tile(n_pad, _TM_PREF), n_pad)
    tk = _pick_tile(n_pad, _TK_PREF)

    # Preferred configuration: column axis collapsed (tn == f_out_pad, so the
    # N^2 A stream runs exactly once) and the whole H slab VMEM-resident.
    tn = f_out_pad
    h_resident = True

    def footprint(tm_, tn_, tk_, resident):
        h_bytes = 2 * (n_pad if resident else tk_) * tn_ * 2
        return (2 * tm_ * tk_ * 2 + h_bytes + 2 * tn_ * 4
                + 2 * tm_ * tn_ * out_isz + tm_ * tn_ * 4)

    cap = 0.9 * budget
    if footprint(tm, tn, tk, h_resident) > cap:
        h_resident = False              # stream H in (tk, tn) tiles instead
    while footprint(tm, tn, tk, h_resident) > cap and tk >= 256 and (tk // 2) % 128 == 0:
        tk //= 2
    while footprint(tm, tn, tk, h_resident) > cap and tm >= 256 and (tm // 2) % 8 == 0:
        tm //= 2
    if footprint(tm, tn, tk, h_resident) > cap:
        tn = _pick_tile(f_out_pad, _TN_PREF)   # last resort: tile the column axis

    grid = (n_pad // tm, f_out_pad // tn, n_pad // tk)
    est = footprint(tm, tn, tk, h_resident)
    vmem_limit = int(min(max(2 * est, 32 * 1024 * 1024), budget))

    if h_resident:
        h_spec = pl.BlockSpec((n_pad, tn), lambda i, j, k: (0, j))
    else:
        h_spec = pl.BlockSpec((tk, tn), lambda i, j, k: (k, j))

    flops = 2 * n_pad * n_pad * f_out_pad
    if h_resident and grid[1] == 1:
        h_bytes_total = n_pad * f_out_pad * 2               # loaded exactly once
    else:
        h_bytes_total = grid[0] * n_pad * f_out_pad * 2     # re-streamed per row tile
    bytes_accessed = (grid[1] * n_pad * n_pad * 2           # A once per column tile
                      + h_bytes_total
                      + grid[0] * grid[1] * tn * 4          # bias
                      + n_pad * f_out_pad * out_isz)        # Y

    kernel = functools.partial(_agg_kernel, tk=tk, h_resident=h_resident)
    return pl.pallas_call(
        kernel,
        out_shape=jax.ShapeDtypeStruct((n_pad, f_out_pad), out_dtype),
        grid_spec=pltpu.PrefetchScalarGridSpec(
            num_scalar_prefetch=0,
            grid=grid,
            in_specs=[
                pl.BlockSpec((tm, tk), lambda i, j, k: (i, k)),   # A_norm (bf16)
                h_spec,                                           # H = X@W (bf16)
                pl.BlockSpec((1, tn), lambda i, j, k: (0, j)),    # bias (f32)
            ],
            out_specs=pl.BlockSpec((tm, tn), lambda i, j, k: (i, j)),
            scratch_shapes=[pltpu.VMEM((tm, tn), jnp.float32)],
        ),
        compiler_params=pltpu.CompilerParams(
            dimension_semantics=("parallel", "parallel", "arbitrary"),
            vmem_limit_bytes=vmem_limit,
        ),
        cost_estimate=pl.CostEstimate(flops=int(flops), transcendentals=0,
                                      bytes_accessed=int(bytes_accessed)),
    )(a_bf16, h_bf16, b_f32)


# ---------------------------------------------------------------------------
# Glue: dense symmetric-normalized adjacency from edge_index (bf16).
# ---------------------------------------------------------------------------
def _build_normalized_adjacency(edge_index, num_nodes, n_pad):
    # TODO(synk): replace the dense N^2 build/stream with CSR row pointers via
    # PrefetchScalarGridSpec + gather DMA + segment sum for large graphs.
    src = edge_index[0].astype(jnp.int32)
    dst = edge_index[1].astype(jnp.int32)
    a = jnp.zeros((n_pad, n_pad), jnp.float32)
    # PyG convention: messages flow source -> target; duplicate edges accumulate.
    a = a.at[dst, src].add(1.0)
    self_loop = (jnp.arange(n_pad) < num_nodes).astype(jnp.float32)
    a = a + jnp.diag(self_loop)
    deg = jnp.sum(a, axis=1)
    d_inv_sqrt = jnp.where(deg > 0.0, lax.rsqrt(deg), 0.0)
    # Single fused elementwise pass (two broadcast multiplies + bf16 convert).
    return (a * d_inv_sqrt[:, None] * d_inv_sqrt[None, :]).astype(jnp.bfloat16)


def gr_forward(x, edge_index, params, final_dtype=None):
    """output = x (+0.0 folded into the padded bf16 load), then the layer stack."""
    if len(params) == 0:
        return x + 0.0          # empty list_modules: forward is the identity copy

    n, f_in = x.shape
    out_dtype_final = x.dtype if final_dtype is None else final_dtype
    n_pad, _ = _pad_for_tile(n, _TM_PREF)
    f_in_pad = _round_up(max(f_in, 128), 128)

    a_bf16 = _build_normalized_adjacency(edge_index, n, n_pad)

    # `output = x + 0.0` folded into the first layer's padded bf16 load.
    h = jnp.zeros((n_pad, f_in_pad), jnp.bfloat16).at[:n, :f_in].set(
        x.astype(jnp.bfloat16))

    f_out = f_in
    for li, (w, b) in enumerate(params):
        f_in_cur, f_out = w.shape
        f_out_pad = _round_up(max(f_out, 128), 128)
        w_pad = jnp.zeros((h.shape[1], f_out_pad), jnp.bfloat16).at[
            :f_in_cur, :f_out].set(w.astype(jnp.bfloat16))
        b_pad = jnp.zeros((1, f_out_pad), jnp.float32).at[0, :f_out].set(b)

        # Feature transform once per layer (hoisted), lane-dense bf16 handoff.
        h_xw = _matmul_pallas(h, w_pad, jnp.bfloat16)
        out_dtype = jnp.bfloat16 if li < len(params) - 1 else out_dtype_final
        h = _agg_pallas(a_bf16, h_xw, b_pad, out_dtype)

    # TODO(synk): fold this unpad slice into the downstream consumer when one exists.
    return h[:n, :f_out]


class GrModuleWithLayeredEvalPallas:
    """JAX/Pallas port of GrModuleWithLayeredEval with a synthetic 2-layer GCN stack."""

    def __init__(self, dim_input, dim_output, key, num_layers=2):
        self.dim_input = dim_input
        self.dim_output = dim_output
        dims = [dim_input] + [dim_output] * num_layers
        params = []
        for li in range(num_layers):
            key, kw, kb = jax.random.split(key, 3)
            w = jax.random.normal(kw, (dims[li], dims[li + 1]), jnp.float32)
            w = w / jnp.sqrt(jnp.float32(dims[li]))
            b = 0.1 * jax.random.normal(kb, (dims[li + 1],), jnp.float32)
            params.append((w, b))
        self.params = params
        self._forward = jax.jit(gr_forward)

    def __call__(self, x, edge_index):
        return self._forward(x, edge_index, self.params)

    def reference(self, x, edge_index):
        """Pure-JAX reference replicating the kernel's bf16/f32 mixed precision."""
        n = x.shape[0]
        n_pad, _ = _pad_for_tile(n, _TM_PREF)
        a_bf = _build_normalized_adjacency(edge_index, n, n_pad)[:n, :n]
        h = x.astype(jnp.bfloat16)
        for li, (w, b) in enumerate(self.params):
            xw = jnp.dot(h, w.astype(jnp.bfloat16),
                         preferred_element_type=jnp.float32).astype(jnp.bfloat16)
            agg = jnp.dot(a_bf, xw, preferred_element_type=jnp.float32) + b[None, :]
            h = (agg.astype(jnp.bfloat16) if li < len(self.params) - 1
                 else agg.astype(x.dtype))
        return h


if __name__ == "__main__":
    key = jax.random.PRNGKey(0)
    n_nodes, n_edges = 64, 128
    dim_input, dim_output = 16, 32

    kx, ks, kd, kp = jax.random.split(key, 4)
    x = jax.random.normal(kx, (n_nodes, dim_input), jnp.float32)
    src = jax.random.randint(ks, (n_edges,), 0, n_nodes, dtype=jnp.int32)
    dst = jax.random.randint(kd, (n_edges,), 0, n_nodes, dtype=jnp.int32)
    # Undirected graph in PyG [2, E] layout (row 0 = source, row 1 = target).
    edge_index = jnp.stack([jnp.concatenate([src, dst]),
                            jnp.concatenate([dst, src])]).astype(jnp.int32)

    model = GrModuleWithLayeredEvalPallas(dim_input, dim_output, key=kp)

    out = jax.block_until_ready(model(x, edge_index))
    assert out.shape == (n_nodes, dim_output), out.shape

    ref = model.reference(x, edge_index)
    err = float(jnp.max(jnp.abs(out - ref)))
    if err > 5e-2:
        raise AssertionError(f"Pallas output mismatch: max abs err = {err}")

    print("KERNEL_OK")
</pallas_src>

<mosaic_0001>
module attributes {stable_mosaic.version = 11 : i64} {
  func.func private @main(%arg0: i32) attributes {dimension_semantics = [#tpu.dimension_semantics<core_parallel>], iteration_bounds = array<i64: 2>, tpu.core_type = #tpu.core_type<sc_scalar_subcore>, window_params = []} {
    return
  }
}

module attributes {stable_mosaic.version = 11 : i64} {
  func.func private @main(%arg0: i32) attributes {dimension_semantics = [#tpu.dimension_semantics<core_parallel>], iteration_bounds = array<i64: 2>, tpu.core_type = #tpu.core_type<sc_scalar_subcore>, window_params = []} {
    return
  }
}

module attributes {stable_mosaic.version = 11 : i64} {
  func.func @_matmul_kernel(%arg0: i32, %arg1: i32, %arg2: i32, %arg3: memref<128x128xbf16, #tpu.memory_space<vmem>>, %arg4: memref<128x128xbf16, #tpu.memory_space<vmem>>, %arg5: memref<128x128xbf16, #tpu.memory_space<vmem>>, %arg6: memref<128x128xf32, #tpu.memory_space<vmem>>) attributes {dimension_semantics = [#tpu.dimension_semantics<parallel>, #tpu.dimension_semantics<parallel>, #tpu.dimension_semantics<arbitrary>], iteration_bounds = array<i64: 1, 1, 1>, scalar_prefetch = 0 : i64, scratch_operands = 1 : i64, tpu.core_type = #tpu.core_type<tc>, window_params = [{transform_indices = @transform_0, window_bounds = array<i64: 128, 128>}, {transform_indices = @transform_1, window_bounds = array<i64: 128, 128>}, {transform_indices = @transform_2, window_bounds = array<i64: 128, 128>}]} {
    %c0_i32 = arith.constant 0 : i32
    %0 = arith.cmpi eq, %arg2, %c0_i32 : i32
    %1 = arith.extui %0 : i1 to i32
    %c0_i32_0 = arith.constant 0 : i32
    %2 = arith.cmpi ne, %1, %c0_i32_0 : i32
    scf.if %2 {
      %cst_10 = arith.constant 0.000000e+00 : f32
      %12 = vector.broadcast %cst_10 : f32 to vector<128x128xf32>
      %c0_11 = arith.constant 0 : index
      %c0_12 = arith.constant 0 : index
      %13 = vector.load %arg6[%c0_11, %c0_12] : memref<128x128xf32, #tpu.memory_space<vmem>>, vector<128x128xf32>
      tpu.vector_store %arg6[%c0_11, %c0_12], %12 {strides = array<i32>} : memref<128x128xf32, #tpu.memory_space<vmem>>, vector<128x128xf32>,
    } else {
    }
    %c0 = arith.constant 0 : index
    %c0_1 = arith.constant 0 : index
    %3 = vector.load %arg6[%c0, %c0_1] : memref<128x128xf32, #tpu.memory_space<vmem>>, vector<128x128xf32>
    %c0_2 = arith.constant 0 : index
    %c0_3 = arith.constant 0 : index
    %4 = vector.load %arg3[%c0_2, %c0_3] : memref<128x128xbf16, #tpu.memory_space<vmem>>, vector<128x128xbf16>
    %c0_4 = arith.constant 0 : index
    %c0_5 = arith.constant 0 : index
    %5 = vector.load %arg4[%c0_4, %c0_5] : memref<128x128xbf16, #tpu.memory_space<vmem>>, vector<128x128xbf16>
    %cst = arith.constant dense<0.000000e+00> : vector<128x128xf32>
    %6 = tpu.matmul %4, %5, %cst {dimension_numbers = #tpu.dot_dimension_numbers<[1], [0], [0], [1], [0, 0, 1, 1], [], []>} : vector<128x128xbf16>, vector<128x128xbf16>, vector<128x128xf32> -> vector<128x128xf32>
    %7 = arith.addf %3, %6 : vector<128x128xf32>
    %c0_6 = arith.constant 0 : index
    %c0_7 = arith.constant 0 : index
    %8 = vector.load %arg6[%c0_6, %c0_7] : memref<128x128xf32, #tpu.memory_space<vmem>>, vector<128x128xf32>
    tpu.vector_store %arg6[%c0_6, %c0_7], %7 {strides = array<i32>} : memref<128x128xf32, #tpu.memory_space<vmem>>, vector<128x128xf32>,
    %c0_i32_8 = arith.constant 0 : i32
    %9 = arith.cmpi eq, %arg2, %c0_i32_8 : i32
    %10 = arith.extui %9 : i1 to i32
    %c0_i32_9 = arith.constant 0 : i32
    %11 = arith.cmpi ne, %10, %c0_i32_9 : i32
    scf.if %11 {
      %c0_10 = arith.constant 0 : index
      %c0_11 = arith.constant 0 : index
      %12 = vector.load %arg6[%c0_10, %c0_11] : memref<128x128xf32, #tpu.memory_space<vmem>>, vector<128x128xf32>
      %13 = arith.truncf %12 : vector<128x128xf32> to vector<128x128xbf16>
      %c0_12 = arith.constant 0 : index
      %c0_13 = arith.constant 0 : index
      %14 = vector.load %arg5[%c0_12, %c0_13] : memref<128x128xbf16, #tpu.memory_space<vmem>>, vector<128x128xbf16>
      tpu.vector_store %arg5[%c0_12, %c0_13], %13 {strides = array<i32>} : memref<128x128xbf16, #tpu.memory_space<vmem>>, vector<128x128xbf16>,
    } else {
    }
    return
  }
  func.func @transform_0(%arg0: i32, %arg1: i32, %arg2: i32) -> (i32, i32) {
    %c0_i32 = arith.constant 0 : i32
    return %arg0, %arg2 : i32, i32
  }
  func.func @transform_1(%arg0: i32, %arg1: i32, %arg2: i32) -> (i32, i32) {
    %c0_i32 = arith.constant 0 : i32
    return %arg2, %arg1 : i32, i32
  }
  func.func @transform_2(%arg0: i32, %arg1: i32, %arg2: i32) -> (i32, i32) {
    %c0_i32 = arith.constant 0 : i32
    return %arg0, %arg1 : i32, i32
  }
}

module attributes {stable_mosaic.version = 11 : i64} {
  func.func @_agg_kernel(%arg0: i32, %arg1: i32, %arg2: i32, %arg3: memref<128x128xbf16, #tpu.memory_space<vmem>>, %arg4: memref<128x128xbf16, #tpu.memory_space<vmem>>, %arg5: memref<1x128xf32, #tpu.memory_space<vmem>>, %arg6: memref<128x128xbf16, #tpu.memory_space<vmem>>, %arg7: memref<128x128xf32, #tpu.memory_space<vmem>>) attributes {dimension_semantics = [#tpu.dimension_semantics<parallel>, #tpu.dimension_semantics<parallel>, #tpu.dimension_semantics<arbitrary>], iteration_bounds = array<i64: 1, 1, 1>, scalar_prefetch = 0 : i64, scratch_operands = 1 : i64, tpu.core_type = #tpu.core_type<tc>, window_params = [{transform_indices = @transform_0, window_bounds = array<i64: 128, 128>}, {transform_indices = @transform_1, window_bounds = array<i64: 128, 128>}, {transform_indices = @transform_2, window_bounds = array<i64: 1, 128>}, {transform_indices = @transform_3, window_bounds = array<i64: 128, 128>}]} {
    %c0_i32 = arith.constant 0 : i32
    %0 = arith.cmpi eq, %arg2, %c0_i32 : i32
    %1 = arith.extui %0 : i1 to i32
    %c0_i32_0 = arith.constant 0 : i32
    %2 = arith.cmpi ne, %1, %c0_i32_0 : i32
    scf.if %2 {
      %cst_9 = arith.constant 0.000000e+00 : f32
      %15 = vector.broadcast %cst_9 : f32 to vector<128x128xf32>
      %c0_10 = arith.constant 0 : index
      %c0_11 = arith.constant 0 : index
      %16 = vector.load %arg7[%c0_10, %c0_11] : memref<128x128xf32, #tpu.memory_space<vmem>>, vector<128x128xf32>
      tpu.vector_store %arg7[%c0_10, %c0_11], %15 {strides = array<i32>} : memref<128x128xf32, #tpu.memory_space<vmem>>, vector<128x128xf32>,
    } else {
    }
    %c128_i32 = arith.constant 128 : i32
    %3 = arith.muli %arg2, %c128_i32 : i32
    %4 = tpu.assume_multiple %3, 128 : i32
    %5 = arith.index_cast %4 : i32 to index
    %c0 = arith.constant 0 : index
    %6 = vector.load %arg4[%5, %c0] : memref<128x128xbf16, #tpu.memory_space<vmem>>, vector<128x128xbf16>
    %c0_1 = arith.constant 0 : index
    %c0_2 = arith.constant 0 : index
    %7 = vector.load %arg7[%c0_1, %c0_2] : memref<128x128xf32, #tpu.memory_space<vmem>>, vector<128x128xf32>
    %c0_3 = arith.constant 0 : index
    %c0_4 = arith.constant 0 : index
    %8 = vector.load %arg3[%c0_3, %c0_4] : memref<128x128xbf16, #tpu.memory_space<vmem>>, vector<128x128xbf16>
    %cst = arith.constant dense<0.000000e+00> : vector<128x128xf32>
    %9 = tpu.matmul %8, %6, %cst {dimension_numbers = #tpu.dot_dimension_numbers<[1], [0], [0], [1], [0, 0, 1, 1], [], []>} : vector<128x128xbf16>, vector<128x128xbf16>, vector<128x128xf32> -> vector<128x128xf32>
    %10 = arith.addf %7, %9 : vector<128x128xf32>
    %c0_5 = arith.constant 0 : index
    %c0_6 = arith.constant 0 : index
    %11 = vector.load %arg7[%c0_5, %c0_6] : memref<128x128xf32, #tpu.memory_space<vmem>>, vector<128x128xf32>
    tpu.vector_store %arg7[%c0_5, %c0_6], %10 {strides = array<i32>} : memref<128x128xf32, #tpu.memory_space<vmem>>, vector<128x128xf32>,
    %c0_i32_7 = arith.constant 0 : i32
    %12 = arith.cmpi eq, %arg2, %c0_i32_7 : i32
    %13 = arith.extui %12 : i1 to i32
    %c0_i32_8 = arith.constant 0 : i32
    %14 = arith.cmpi ne, %13, %c0_i32_8 : i32
    scf.if %14 {
      %c0_9 = arith.constant 0 : index
      %c0_10 = arith.constant 0 : index
      %15 = vector.load %arg7[%c0_9, %c0_10] : memref<128x128xf32, #tpu.memory_space<vmem>>, vector<128x128xf32>
      %c0_11 = arith.constant 0 : index
      %c0_12 = arith.constant 0 : index
      %16 = vector.load %arg5[%c0_11, %c0_12] : memref<1x128xf32, #tpu.memory_space<vmem>>, vector<1x128xf32>
      %17 = vector.broadcast %16 : vector<1x128xf32> to vector<128x128xf32>
      %18 = arith.addf %15, %17 : vector<128x128xf32>
      %19 = arith.truncf %18 : vector<128x128xf32> to vector<128x128xbf16>
      %c0_13 = arith.constant 0 : index
      %c0_14 = arith.constant 0 : index
      %20 = vector.load %arg6[%c0_13, %c0_14] : memref<128x128xbf16, #tpu.memory_space<vmem>>, vector<128x128xbf16>
      tpu.vector_store %arg6[%c0_13, %c0_14], %19 {strides = array<i32>} : memref<128x128xbf16, #tpu.memory_space<vmem>>, vector<128x128xbf16>,
    } else {
    }
    return
  }
  func.func @transform_0(%arg0: i32, %arg1: i32, %arg2: i32) -> (i32, i32) {
    %c0_i32 = arith.constant 0 : i32
    return %arg0, %arg2 : i32, i32
  }
  func.func @transform_1(%arg0: i32, %arg1: i32, %arg2: i32) -> (i32, i32) {
    %c0_i32 = arith.constant 0 : i32
    %c0_i32_0 = arith.constant 0 : i32
    return %c0_i32, %arg1 : i32, i32
  }
  func.func @transform_2(%arg0: i32, %arg1: i32, %arg2: i32) -> (i32, i32) {
    %c0_i32 = arith.constant 0 : i32
    %c0_i32_0 = arith.constant 0 : i32
    return %c0_i32, %arg1 : i32, i32
  }
  func.func @transform_3(%arg0: i32, %arg1: i32, %arg2: i32) -> (i32, i32) {
    %c0_i32 = arith.constant 0 : i32
    return %arg0, %arg1 : i32, i32
  }
}

module attributes {stable_mosaic.version = 11 : i64} {
  func.func @_agg_kernel(%arg0: i32, %arg1: i32, %arg2: i32, %arg3: memref<128x128xbf16, #tpu.memory_space<vmem>>, %arg4: memref<128x128xbf16, #tpu.memory_space<vmem>>, %arg5: memref<1x128xf32, #tpu.memory_space<vmem>>, %arg6: memref<128x128xf32, #tpu.memory_space<vmem>>, %arg7: memref<128x128xf32, #tpu.memory_space<vmem>>) attributes {dimension_semantics = [#tpu.dimension_semantics<parallel>, #tpu.dimension_semantics<parallel>, #tpu.dimension_semantics<arbitrary>], iteration_bounds = array<i64: 1, 1, 1>, scalar_prefetch = 0 : i64, scratch_operands = 1 : i64, tpu.core_type = #tpu.core_type<tc>, window_params = [{transform_indices = @transform_0, window_bounds = array<i64: 128, 128>}, {transform_indices = @transform_1, window_bounds = array<i64: 128, 128>}, {transform_indices = @transform_2, window_bounds = array<i64: 1, 128>}, {transform_indices = @transform_3, window_bounds = array<i64: 128, 128>}]} {
    %c0_i32 = arith.constant 0 : i32
    %0 = arith.cmpi eq, %arg2, %c0_i32 : i32
    %1 = arith.extui %0 : i1 to i32
    %c0_i32_0 = arith.constant 0 : i32
    %2 = arith.cmpi ne, %1, %c0_i32_0 : i32
    scf.if %2 {
      %cst_9 = arith.constant 0.000000e+00 : f32
      %15 = vector.broadcast %cst_9 : f32 to vector<128x128xf32>
      %c0_10 = arith.constant 0 : index
      %c0_11 = arith.constant 0 : index
      %16 = vector.load %arg7[%c0_10, %c0_11] : memref<128x128xf32, #tpu.memory_space<vmem>>, vector<128x128xf32>
      tpu.vector_store %arg7[%c0_10, %c0_11], %15 {strides = array<i32>} : memref<128x128xf32, #tpu.memory_space<vmem>>, vector<128x128xf32>,
    } else {
    }
    %c128_i32 = arith.constant 128 : i32
    %3 = arith.muli %arg2, %c128_i32 : i32
    %4 = tpu.assume_multiple %3, 128 : i32
    %5 = arith.index_cast %4 : i32 to index
    %c0 = arith.constant 0 : index
    %6 = vector.load %arg4[%5, %c0] : memref<128x128xbf16, #tpu.memory_space<vmem>>, vector<128x128xbf16>
    %c0_1 = arith.constant 0 : index
    %c0_2 = arith.constant 0 : index
    %7 = vector.load %arg7[%c0_1, %c0_2] : memref<128x128xf32, #tpu.memory_space<vmem>>, vector<128x128xf32>
    %c0_3 = arith.constant 0 : index
    %c0_4 = arith.constant 0 : index
    %8 = vector.load %arg3[%c0_3, %c0_4] : memref<128x128xbf16, #tpu.memory_space<vmem>>, vector<128x128xbf16>
    %cst = arith.constant dense<0.000000e+00> : vector<128x128xf32>
    %9 = tpu.matmul %8, %6, %cst {dimension_numbers = #tpu.dot_dimension_numbers<[1], [0], [0], [1], [0, 0, 1, 1], [], []>} : vector<128x128xbf16>, vector<128x128xbf16>, vector<128x128xf32> -> vector<128x128xf32>
    %10 = arith.addf %7, %9 : vector<128x128xf32>
    %c0_5 = arith.constant 0 : index
    %c0_6 = arith.constant 0 : index
    %11 = vector.load %arg7[%c0_5, %c0_6] : memref<128x128xf32, #tpu.memory_space<vmem>>, vector<128x128xf32>
    tpu.vector_store %arg7[%c0_5, %c0_6], %10 {strides = array<i32>} : memref<128x128xf32, #tpu.memory_space<vmem>>, vector<128x128xf32>,
    %c0_i32_7 = arith.constant 0 : i32
    %12 = arith.cmpi eq, %arg2, %c0_i32_7 : i32
    %13 = arith.extui %12 : i1 to i32
    %c0_i32_8 = arith.constant 0 : i32
    %14 = arith.cmpi ne, %13, %c0_i32_8 : i32
    scf.if %14 {
      %c0_9 = arith.constant 0 : index
      %c0_10 = arith.constant 0 : index
      %15 = vector.load %arg7[%c0_9, %c0_10] : memref<128x128xf32, #tpu.memory_space<vmem>>, vector<128x128xf32>
      %c0_11 = arith.constant 0 : index
      %c0_12 = arith.constant 0 : index
      %16 = vector.load %arg5[%c0_11, %c0_12] : memref<1x128xf32, #tpu.memory_space<vmem>>, vector<1x128xf32>
      %17 = vector.broadcast %16 : vector<1x128xf32> to vector<128x128xf32>
      %18 = arith.addf %15, %17 : vector<128x128xf32>
      %c0_13 = arith.constant 0 : index
      %c0_14 = arith.constant 0 : index
      %19 = vector.load %arg6[%c0_13, %c0_14] : memref<128x128xf32, #tpu.memory_space<vmem>>, vector<128x128xf32>
      tpu.vector_store %arg6[%c0_13, %c0_14], %18 {strides = array<i32>} : memref<128x128xf32, #tpu.memory_space<vmem>>, vector<128x128xf32>,
    } else {
    }
    return
  }
  func.func @transform_0(%arg0: i32, %arg1: i32, %arg2: i32) -> (i32, i32) {
    %c0_i32 = arith.constant 0 : i32
    return %arg0, %arg2 : i32, i32
  }
  func.func @transform_1(%arg0: i32, %arg1: i32, %arg2: i32) -> (i32, i32) {
    %c0_i32 = arith.constant 0 : i32
    %c0_i32_0 = arith.constant 0 : i32
    return %c0_i32, %arg1 : i32, i32
  }
  func.func @transform_2(%arg0: i32, %arg1: i32, %arg2: i32) -> (i32, i32) {
    %c0_i32 = arith.constant 0 : i32
    %c0_i32_0 = arith.constant 0 : i32
    return %c0_i32, %arg1 : i32, i32
  }
  func.func @transform_3(%arg0: i32, %arg1: i32, %arg2: i32) -> (i32, i32) {
    %c0_i32 = arith.constant 0 : i32
    return %arg0, %arg1 : i32, i32
  }
}

</mosaic_0001>

<llo_original>
// kernel: gr_forward.4
$region0: #{gr_forward.4}
  #allocation0 [shape = 'u32[]', space=smem, size = 0x4, offset = 0x4, fixed_abs, tag = 'smem constant byte address 0x4 - core index']
  #allocation1 [shape = 'u32[144,128]{1,0:T(1,128)}', space=vmem, size = 0x12000, scoped, tag = 'internal scratch']
  #allocation2 [shape = 'f32[128,128]{1,0:T(8,128)}', space=vmem, size = 0x10000, scoped, tag = 'scratch operand']
  %s0 = inlined_call_operand.vmem [shape: bf16[128,128], index: 0, kind: input, shape index: {}]
  %s1 = inlined_call_operand.vmem [shape: bf16[128,128], index: 1, kind: input, shape index: {}]
  %s2 = inlined_call_operand.vmem [shape: bf16[128,128], index: 2, kind: output, shape index: {}]
  %s3 = sld [smem:[#allocation0]]
  $region26: #{gr_forward.4} parent=0
    _
  %s5 = ssub.s32 1, %s3
  %s6 = scalar_select 0, %s5, %s3
  // Predicated region
  $region2: #{gr_forward.4} parent=0 // pred_check
    _
  $region3: #{gr_forward.4} parent=0 // pred_check_branch
    %8 = sbr.rel (0) target = $region5
  $region4: #{gr_forward.4} parent=0 // pred_region
    _
  $region5: #{gr_forward.4} parent=0 // pred_fallthru
    _
  // Predicated region
  $region6: #{gr_forward.4} parent=0 // pred_check
    _
  $region7: #{gr_forward.4} parent=0 // pred_check_branch
    %10 = sbr.rel (0) target = $region9
  $region8: #{gr_forward.4} parent=0 // pred_region
    _
  $region9: #{gr_forward.4} parent=0 // pred_fallthru
    _
  %p12 = scmp.eq.s32.totalorder 0, 0
  // Predicated region
  $region10: #{gr_forward.4} parent=0 // pred_check
    %p13 = pneg %p12
  $region11: #{gr_forward.4} parent=0 // pred_check_branch
    %15 = sbr.rel (%p13) target = $region13
  $region12: #{gr_forward.4} parent=0 // pred_region
    %16 = vst [vmem:[#allocation2] sm:$0xff] 0.0
    %17 = vst [vmem:[#allocation2 + $0x8] sm:$0xff] 0.0
    %18 = vst [vmem:[#allocation2 + $0x10] sm:$0xff] 0.0
    %19 = vst [vmem:[#allocation2 + $0x18] sm:$0xff] 0.0
    %20 = vst [vmem:[#allocation2 + $0x20] sm:$0xff] 0.0
    %21 = vst [vmem:[#allocation2 + $0x28] sm:$0xff] 0.0
    %22 = vst [vmem:[#allocation2 + $0x30] sm:$0xff] 0.0
    %23 = vst [vmem:[#allocation2 + $0x38] sm:$0xff] 0.0
    %24 = vst [vmem:[#allocation2 + $0x40] sm:$0xff] 0.0
    %25 = vst [vmem:[#allocation2 + $0x48] sm:$0xff] 0.0
    %26 = vst [vmem:[#allocation2 + $0x50] sm:$0xff] 0.0
    %27 = vst [vmem:[#allocation2 + $0x58] sm:$0xff] 0.0
    %28 = vst [vmem:[#allocation2 + $0x60] sm:$0xff] 0.0
    %29 = vst [vmem:[#allocation2 + $0x68] sm:$0xff] 0.0
    %30 = vst [vmem:[#allocation2 + $0x70] sm:$0xff] 0.0
    %31 = vst [vmem:[#allocation2 + $0x78] sm:$0xff] 0.0
  $region13: #{gr_forward.4} parent=0 // pred_fallthru
    _
  %v32 = vld [vmem:[#allocation2] sm:$0xff]
  %v33 = vld [vmem:[#allocation2 + $0x8] sm:$0xff]
  %v34 = vld [vmem:[#allocation2 + $0x10] sm:$0xff]
  %v35 = vld [vmem:[#allocation2 + $0x18] sm:$0xff]
  %v36 = vld [vmem:[#allocation2 + $0x20] sm:$0xff]
  %v37 = vld [vmem:[#allocation2 + $0x28] sm:$0xff]
  %v38 = vld [vmem:[#allocation2 + $0x30] sm:$0xff]
  %v39 = vld [vmem:[#allocation2 + $0x38] sm:$0xff]
  %v40 = vld [vmem:[#allocation2 + $0x40] sm:$0xff]
  %v41 = vld [vmem:[#allocation2 + $0x48] sm:$0xff]
  %v42 = vld [vmem:[#allocation2 + $0x50] sm:$0xff]
  %v43 = vld [vmem:[#allocation2 + $0x58] sm:$0xff]
  %v44 = vld [vmem:[#allocation2 + $0x60] sm:$0xff]
  %v45 = vld [vmem:[#allocation2 + $0x68] sm:$0xff]
  %v46 = vld [vmem:[#allocation2 + $0x70] sm:$0xff]
  %v47 = vld [vmem:[#allocation2 + $0x78] sm:$0xff]
  %v48 = vld [vmem:[%s0] sm:$0xf]
  %v49 = vld [vmem:[%s0 + $0x4] sm:$0xf]
  %v50 = vld [vmem:[%s0 + $0x8] sm:$0xf]
  %v51 = vld [vmem:[%s0 + $0xc] sm:$0xf]
  %v52 = vld [vmem:[%s0 + $0x10] sm:$0xf]
  %v53 = vld [vmem:[%s0 + $0x14] sm:$0xf]
  %v54 = vld [vmem:[%s0 + $0x18] sm:$0xf]
  %v55 = vld [vmem:[%s0 + $0x1c] sm:$0xf]
  %v56 = vld [vmem:[%s0 + $0x20] sm:$0xf]
  %v57 = vld [vmem:[%s0 + $0x24] sm:$0xf]
  %v58 = vld [vmem:[%s0 + $0x28] sm:$0xf]
  %v59 = vld [vmem:[%s0 + $0x2c] sm:$0xf]
  %v60 = vld [vmem:[%s0 + $0x30] sm:$0xf]
  %v61 = vld [vmem:[%s0 + $0x34] sm:$0xf]
  %v62 = vld [vmem:[%s0 + $0x38] sm:$0xf]
  %v63 = vld [vmem:[%s0 + $0x3c] sm:$0xf]
  %v64 = vld [vmem:[%s1] sm:$0xf]
  %v65 = vld [vmem:[%s1 + $0x4] sm:$0xf]
  %v66 = vld [vmem:[%s1 + $0x8] sm:$0xf]
  %v67 = vld [vmem:[%s1 + $0xc] sm:$0xf]
  %v68 = vld [vmem:[%s1 + $0x10] sm:$0xf]
  %v69 = vld [vmem:[%s1 + $0x14] sm:$0xf]
  %v70 = vld [vmem:[%s1 + $0x18] sm:$0xf]
  %v71 = vld [vmem:[%s1 + $0x1c] sm:$0xf]
  %v72 = vld [vmem:[%s1 + $0x20] sm:$0xf]
  %v73 = vld [vmem:[%s1 + $0x24] sm:$0xf]
  %v74 = vld [vmem:[%s1 + $0x28] sm:$0xf]
  %v75 = vld [vmem:[%s1 + $0x2c] sm:$0xf]
  %v76 = vld [vmem:[%s1 + $0x30] sm:$0xf]
  %v77 = vld [vmem:[%s1 + $0x34] sm:$0xf]
  %v78 = vld [vmem:[%s1 + $0x38] sm:$0xf]
  %v79 = vld [vmem:[%s1 + $0x3c] sm:$0xf]
  %v96 = vunpack.c.l.b16 %v48
  %v97 = vunpack.c.l.b16 %v49
  %v98 = vunpack.c.l.b16 %v50
  %v99 = vunpack.c.l.b16 %v51
  %v100 = vunpack.c.l.b16 %v52
  %v101 = vunpack.c.l.b16 %v53
  %v102 = vunpack.c.l.b16 %v54
  %v103 = vunpack.c.l.b16 %v55
  %v104 = vunpack.c.l.b16 %v56
  %v105 = vunpack.c.l.b16 %v57
  %v106 = vunpack.c.l.b16 %v58
  %v107 = vunpack.c.l.b16 %v59
  %v108 = vunpack.c.l.b16 %v60
  %v109 = vunpack.c.l.b16 %v61
  %v110 = vunpack.c.l.b16 %v62
  %v111 = vunpack.c.l.b16 %v63
  %v112 = vpack.c.b16 %v97, %v96
  %v113 = vpack.c.b16 %v99, %v98
  %v114 = vpack.c.b16 %v101, %v100
  %v115 = vpack.c.b16 %v103, %v102
  %v116 = vpack.c.b16 %v105, %v104
  %v117 = vpack.c.b16 %v107, %v106
  %v118 = vpack.c.b16 %v109, %v108
  %v119 = vpack.c.b16 %v111, %v110
  %v144 = vunpack.c.l.b16 %v64
  %v145 = vunpack.c.l.b16 %v65
  %v146 = vunpack.c.l.b16 %v66
  %v147 = vunpack.c.l.b16 %v67
  %v148 = vunpack.c.l.b16 %v68
  %v149 = vunpack.c.l.b16 %v69
  %v150 = vunpack.c.l.b16 %v70
  %v151 = vunpack.c.l.b16 %v71
  %v152 = vunpack.c.l.b16 %v72
  %v153 = vunpack.c.l.b16 %v73
  %v154 = vunpack.c.l.b16 %v74
  %v155 = vunpack.c.l.b16 %v75
  %v156 = vunpack.c.l.b16 %v76
  %v157 = vunpack.c.l.b16 %v77
  %v158 = vunpack.c.l.b16 %v78
  %v159 = vunpack.c.l.b16 %v79
  %v160 = vpack.c.b16 %v145, %v144
  %v161 = vpack.c.b16 %v147, %v146
  %v162 = vpack.c.b16 %v149, %v148
  %v163 = vpack.c.b16 %v151, %v150
  %v164 = vpack.c.b16 %v153, %v152
  %v165 = vpack.c.b16 %v155, %v154
  %v166 = vpack.c.b16 %v157, %v156
  %v167 = vpack.c.b16 %v159, %v158
  %176 = vmatprep.subr.bf16.mxu0 0
  %177 = vmatpush1.bf16.msra.mxu0 %v167
  %178 = vmatprep.subr.bf16.mxu0 0
  %179 = vmatpush1.bf16.msra.mxu0 %v166
  %180 = vmatprep.subr.bf16.mxu0 0
  %181 = vmatpush1.bf16.msra.mxu0 %v165
  %182 = vmatprep.subr.bf16.mxu0 0
  %183 = vmatpush1.bf16.msra.mxu0 %v164
  %184 = vmatprep.subr.bf16.mxu0 0
  %185 = vmatpush1.bf16.msra.mxu0 %v163
  %186 = vmatprep.subr.bf16.mxu0 0
  %187 = vmatpush1.bf16.msra.mxu0 %v162
  %188 = vmatprep.subr.bf16.mxu0 0
  %189 = vmatpush1.bf16.msra.mxu0 %v161
  %190 = vmatprep.subr.bf16.mxu0 0
  %191 = vmatpush1.bf16.msra.mxu0 %v160
  %192 = vmatprep.subr.bf16.mxu0 0
  %193 = vmatpush2.bf16.msra.mxu0 0
  %194 = vmatprep.subr.bf16.mxu0 0
  %195 = vmatpush2.bf16.msra.mxu0 0
  %196 = vmatprep.subr.bf16.mxu0 0
  %197 = vmatpush2.bf16.msra.mxu0 0
  %198 = vmatprep.subr.bf16.mxu0 0
  %199 = vmatpush2.bf16.msra.mxu0 0
  %200 = vmatprep.subr.bf16.mxu0 0
  %201 = vmatpush2.bf16.msra.mxu0 0
  %202 = vmatprep.subr.bf16.mxu0 0
  %203 = vmatpush2.bf16.msra.mxu0 0
  %204 = vmatprep.subr.bf16.mxu0 0
  %205 = vmatpush2.bf16.msra.mxu0 0
  %206 = vmatprep.subr.bf16.mxu0 0
  %207 = vmatpush2.bf16.msra.mxu0 0
  %208 = vmatprep.mubr.bf16.mxu0 0
  %209 = vmatmul.mubr.bf16.gmra.mxu0 %v112
  %v210 = vpop.f32.mrf.mxu0
  %v211 = vadd.f32 0.0, %v210
  %v212 = vpop.f32.mrf.mxu0
  %v213 = vpop.f32.mrf.mxu0
  %v214 = vadd.f32 0.0, %v213
  %v215 = vpop.f32.mrf.mxu0
  %216 = vmatprep.mubr.bf16.mxu0 0
  %217 = vmatmul.mubr.bf16.gmra.mxu0 %v113
  %v218 = vpop.f32.mrf.mxu0
  %v219 = vadd.f32 0.0, %v218
  %v220 = vpop.f32.mrf.mxu0
  %v221 = vpop.f32.mrf.mxu0
  %v222 = vadd.f32 0.0, %v221
  %v223 = vpop.f32.mrf.mxu0
  %224 = vmatprep.mubr.bf16.mxu0 0
  %225 = vmatmul.mubr.bf16.gmra.mxu0 %v114
  %v226 = vpop.f32.mrf.mxu0
  %v227 = vadd.f32 0.0, %v226
  %v228 = vpop.f32.mrf.mxu0
  %v229 = vpop.f32.mrf.mxu0
  %v230 = vadd.f32 0.0, %v229
  %v231 = vpop.f32.mrf.mxu0
  %232 = vmatprep.mubr.bf16.mxu0 0
  %233 = vmatmul.mubr.bf16.gmra.mxu0 %v115
  %v234 = vpop.f32.mrf.mxu0
  %v235 = vadd.f32 0.0, %v234
  %v236 = vpop.f32.mrf.mxu0
  %v237 = vpop.f32.mrf.mxu0
  %v238 = vadd.f32 0.0, %v237
  %v239 = vpop.f32.mrf.mxu0
  %240 = vmatprep.mubr.bf16.mxu0 0
  %241 = vmatmul.mubr.bf16.gmra.mxu0 %v116
  %v242 = vpop.f32.mrf.mxu0
  %v243 = vadd.f32 0.0, %v242
  %v244 = vpop.f32.mrf.mxu0
  %v245 = vpop.f32.mrf.mxu0
  %v246 = vadd.f32 0.0, %v245
  %v247 = vpop.f32.mrf.mxu0
  %248 = vmatprep.mubr.bf16.mxu0 0
  %249 = vmatmul.mubr.bf16.gmra.mxu0 %v117
  %v250 = vpop.f32.mrf.mxu0
  %v251 = vadd.f32 0.0, %v250
  %v252 = vpop.f32.mrf.mxu0
  %v253 = vpop.f32.mrf.mxu0
  %v254 = vadd.f32 0.0, %v253
  %v255 = vpop.f32.mrf.mxu0
  %256 = vmatprep.mubr.bf16.mxu0 0
  %257 = vmatmul.mubr.bf16.gmra.mxu0 %v118
  %v258 = vpop.f32.mrf.mxu0
  %v259 = vadd.f32 0.0, %v258
  %v260 = vpop.f32.mrf.mxu0
  %v261 = vpop.f32.mrf.mxu0
  %v262 = vadd.f32 0.0, %v261
  %v263 = vpop.f32.mrf.mxu0
  %264 = vmatprep.mubr.bf16.mxu0 0
  %265 = vmatmul.mubr.bf16.gmra.mxu0 %v119
  %v266 = vpop.f32.mrf.mxu0
  %v267 = vadd.f32 0.0, %v266
  %v268 = vpop.f32.mrf.mxu0
  %v269 = vpop.f32.mrf.mxu0
  %v270 = vadd.f32 0.0, %v269
  %v271 = vpop.f32.mrf.mxu0
  %272 = vdwg.mxu0
  %v273 = vadd.f32 %v32, %v211
  %v274 = vadd.f32 %v33, %v214
  %v275 = vadd.f32 %v34, %v219
  %v276 = vadd.f32 %v35, %v222
  %v277 = vadd.f32 %v36, %v227
  %v278 = vadd.f32 %v37, %v230
  %v279 = vadd.f32 %v38, %v235
  %v280 = vadd.f32 %v39, %v238
  %v281 = vadd.f32 %v40, %v243
  %v282 = vadd.f32 %v41, %v246
  %v283 = vadd.f32 %v42, %v251
  %v284 = vadd.f32 %v43, %v254
  %v285 = vadd.f32 %v44, %v259
  %v286 = vadd.f32 %v45, %v262
  %v287 = vadd.f32 %v46, %v267
  %v288 = vadd.f32 %v47, %v270
  %289 = vst [vmem:[#allocation2] sm:$0xff] %v273
  %290 = vst [vmem:[#allocation2 + $0x8] sm:$0xff] %v274
  %291 = vst [vmem:[#allocation2 + $0x10] sm:$0xff] %v275
  %292 = vst [vmem:[#allocation2 + $0x18] sm:$0xff] %v276
  %293 = vst [vmem:[#allocation2 + $0x20] sm:$0xff] %v277
  %294 = vst [vmem:[#allocation2 + $0x28] sm:$0xff] %v278
  %295 = vst [vmem:[#allocation2 + $0x30] sm:$0xff] %v279
  %296 = vst [vmem:[#allocation2 + $0x38] sm:$0xff] %v280
  %297 = vst [vmem:[#allocation2 + $0x40] sm:$0xff] %v281
  %298 = vst [vmem:[#allocation2 + $0x48] sm:$0xff] %v282
  %299 = vst [vmem:[#allocation2 + $0x50] sm:$0xff] %v283
  %300 = vst [vmem:[#allocation2 + $0x58] sm:$0xff] %v284
  %301 = vst [vmem:[#allocation2 + $0x60] sm:$0xff] %v285
  %302 = vst [vmem:[#allocation2 + $0x68] sm:$0xff] %v286
  %303 = vst [vmem:[#allocation2 + $0x70] sm:$0xff] %v287
  %304 = vst [vmem:[#allocation2 + $0x78] sm:$0xff] %v288
  // Predicated region
  $region14: #{gr_forward.4} parent=0 // pred_check
    %p305 = pneg %p12
  $region15: #{gr_forward.4} parent=0 // pred_check_branch
    %307 = sbr.rel (%p305) target = $region17
  $region16: #{gr_forward.4} parent=0 // pred_region
    %v308 = vld [vmem:[#allocation2] sm:$0xff]
    %v309 = vld [vmem:[#allocation2 + $0x8] sm:$0xff]
    %v310 = vld [vmem:[#allocation2 + $0x10] sm:$0xff]
    %v311 = vld [vmem:[#allocation2 + $0x18] sm:$0xff]
    %v312 = vld [vmem:[#allocation2 + $0x20] sm:$0xff]
    %v313 = vld [vmem:[#allocation2 + $0x28] sm:$0xff]
    %v314 = vld [vmem:[#allocation2 + $0x30] sm:$0xff]
    %v315 = vld [vmem:[#allocation2 + $0x38] sm:$0xff]
    %v316 = vld [vmem:[#allocation2 + $0x40] sm:$0xff]
    %v317 = vld [vmem:[#allocation2 + $0x48] sm:$0xff]
    %v318 = vld [vmem:[#allocation2 + $0x50] sm:$0xff]
    %v319 = vld [vmem:[#allocation2 + $0x58] sm:$0xff]
    %v320 = vld [vmem:[#allocation2 + $0x60] sm:$0xff]
    %v321 = vld [vmem:[#allocation2 + $0x68] sm:$0xff]
    %v322 = vld [vmem:[#allocation2 + $0x70] sm:$0xff]
    %v323 = vld [vmem:[#allocation2 + $0x78] sm:$0xff]
    %v324 = vpack.c.bf16 %v309, %v308
    %v325 = vpack.c.bf16 %v311, %v310
    %v326 = vpack.c.bf16 %v313, %v312
    %v327 = vpack.c.bf16 %v315, %v314
    %v328 = vpack.c.bf16 %v317, %v316
    %v329 = vpack.c.bf16 %v319, %v318
    %v330 = vpack.c.bf16 %v321, %v320
    %v331 = vpack.c.bf16 %v323, %v322
    %v340 = vunpack.c.l.b16 %v324
    %v341 = vunpack.c.h.b16 %v324
    %v342 = vunpack.c.l.b16 %v325
    %v343 = vunpack.c.h.b16 %v325
    %v344 = vunpack.c.l.b16 %v326
    %v345 = vunpack.c.h.b16 %v326
    %v346 = vunpack.c.l.b16 %v327
    %v347 = vunpack.c.h.b16 %v327
    %v348 = vunpack.c.l.b16 %v328
    %v349 = vunpack.c.h.b16 %v328
    %v350 = vunpack.c.l.b16 %v329
    %v351 = vunpack.c.h.b16 %v329
    %v352 = vunpack.c.l.b16 %v330
    %v353 = vunpack.c.h.b16 %v330
    %v354 = vunpack.c.l.b16 %v331
    %v355 = vunpack.c.h.b16 %v331
    %v356 = vpack.c.b16 %v340, %v340
    %v357 = vpack.c.b16 %v341, %v341
    %v358 = vpack.c.b16 %v342, %v342
    %v359 = vpack.c.b16 %v343, %v343
    %v360 = vpack.c.b16 %v344, %v344
    %v361 = vpack.c.b16 %v345, %v345
    %v362 = vpack.c.b16 %v346, %v346
    %v363 = vpack.c.b16 %v347, %v347
    %v364 = vpack.c.b16 %v348, %v348
    %v365 = vpack.c.b16 %v349, %v349
    %v366 = vpack.c.b16 %v350, %v350
    %v367 = vpack.c.b16 %v351, %v351
    %v368 = vpack.c.b16 %v352, %v352
    %v369 = vpack.c.b16 %v353, %v353
    %v370 = vpack.c.b16 %v354, %v354
    %v371 = vpack.c.b16 %v355, %v355
    %388 = vst [vmem:[%s2] sm:$0xf] %v356
    %389 = vst [vmem:[%s2 + $0x4] sm:$0xf] %v357
    %390 = vst [vmem:[%s2 + $0x8] sm:$0xf] %v358
    %391 = vst [vmem:[%s2 + $0xc] sm:$0xf] %v359
    %392 = vst [vmem:[%s2 + $0x10] sm:$0xf] %v360
    %393 = vst [vmem:[%s2 + $0x14] sm:$0xf] %v361
    %394 = vst [vmem:[%s2 + $0x18] sm:$0xf] %v362
    %395 = vst [vmem:[%s2 + $0x1c] sm:$0xf] %v363
    %396 = vst [vmem:[%s2 + $0x20] sm:$0xf] %v364
    %397 = vst [vmem:[%s2 + $0x24] sm:$0xf] %v365
    %398 = vst [vmem:[%s2 + $0x28] sm:$0xf] %v366
    %399 = vst [vmem:[%s2 + $0x2c] sm:$0xf] %v367
    %400 = vst [vmem:[%s2 + $0x30] sm:$0xf] %v368
    %401 = vst [vmem:[%s2 + $0x34] sm:$0xf] %v369
    %402 = vst [vmem:[%s2 + $0x38] sm:$0xf] %v370
    %403 = vst [vmem:[%s2 + $0x3c] sm:$0xf] %v371
  $region17: #{gr_forward.4} parent=0 // pred_fallthru
    _
  // Predicated region
  $region18: #{gr_forward.4} parent=0 // pred_check
    _
  $region19: #{gr_forward.4} parent=0 // pred_check_branch
    %405 = sbr.rel (0) target = $region21
  $region20: #{gr_forward.4} parent=0 // pred_region
    _
  $region21: #{gr_forward.4} parent=0 // pred_fallthru
    _
  // Predicated region
  $region22: #{gr_forward.4} parent=0 // pred_check
    _
  $region23: #{gr_forward.4} parent=0 // pred_check_branch
    %407 = sbr.rel (0) target = $region25
  $region24: #{gr_forward.4} parent=0 // pred_region
    _
  $region25: #{gr_forward.4} parent=0 // pred_fallthru
    _

// kernel: gr_forward.5
$region0: #{gr_forward.5}
  #allocation0 [shape = 'u32[]', space=smem, size = 0x4, offset = 0x4, fixed_abs, tag = 'smem constant byte address 0x4 - core index']
  #allocation1 [shape = 'u32[144,128]{1,0:T(1,128)}', space=vmem, size = 0x12000, scoped, tag = 'internal scratch']
  #allocation2 [shape = 'f32[128,128]{1,0:T(8,128)}', space=vmem, size = 0x10000, scoped, tag = 'scratch operand']
  %s0 = inlined_call_operand.vmem [shape: bf16[128,128], index: 0, kind: input, shape index: {}]
  %s1 = inlined_call_operand.vmem [shape: bf16[128,128], index: 1, kind: input, shape index: {}]
  %s2 = inlined_call_operand.vmem [shape: f32[1,128], index: 2, kind: input, shape index: {}]
  %s3 = inlined_call_operand.vmem [shape: bf16[128,128], index: 3, kind: output, shape index: {}]
  %s4 = sld [smem:[#allocation0]]
  $region30: #{gr_forward.5} parent=0
    _
  %s6 = ssub.s32 1, %s4
  %s7 = scalar_select 0, %s6, %s4
  // Predicated region
  $region2: #{gr_forward.5} parent=0 // pred_check
    _
  $region3: #{gr_forward.5} parent=0 // pred_check_branch
    %9 = sbr.rel (0) target = $region5
  $region4: #{gr_forward.5} parent=0 // pred_region
    _
  $region5: #{gr_forward.5} parent=0 // pred_fallthru
    _
  // Predicated region
  $region6: #{gr_forward.5} parent=0 // pred_check
    _
  $region7: #{gr_forward.5} parent=0 // pred_check_branch
    %11 = sbr.rel (0) target = $region9
  $region8: #{gr_forward.5} parent=0 // pred_region
    _
  $region9: #{gr_forward.5} parent=0 // pred_fallthru
    _
  // Predicated region
  $region10: #{gr_forward.5} parent=0 // pred_check
    _
  $region11: #{gr_forward.5} parent=0 // pred_check_branch
    %13 = sbr.rel (0) target = $region13
  $region12: #{gr_forward.5} parent=0 // pred_region
    _
  $region13: #{gr_forward.5} parent=0 // pred_fallthru
    _
  %p15 = scmp.eq.s32.totalorder 0, 0
  // Predicated region
  $region14: #{gr_forward.5} parent=0 // pred_check
    %p16 = pneg %p15
  $region15: #{gr_forward.5} parent=0 // pred_check_branch
    %18 = sbr.rel (%p16) target = $region17
  $region16: #{gr_forward.5} parent=0 // pred_region
    %19 = vst [vmem:[#allocation2] sm:$0xff] 0.0
    %20 = vst [vmem:[#allocation2 + $0x8] sm:$0xff] 0.0
    %21 = vst [vmem:[#allocation2 + $0x10] sm:$0xff] 0.0
    %22 = vst [vmem:[#allocation2 + $0x18] sm:$0xff] 0.0
    %23 = vst [vmem:[#allocation2 + $0x20] sm:$0xff] 0.0
    %24 = vst [vmem:[#allocation2 + $0x28] sm:$0xff] 0.0
    %25 = vst [vmem:[#allocation2 + $0x30] sm:$0xff] 0.0
    %26 = vst [vmem:[#allocation2 + $0x38] sm:$0xff] 0.0
    %27 = vst [vmem:[#allocation2 + $0x40] sm:$0xff] 0.0
    %28 = vst [vmem:[#allocation2 + $0x48] sm:$0xff] 0.0
    %29 = vst [vmem:[#allocation2 + $0x50] sm:$0xff] 0.0
    %30 = vst [vmem:[#allocation2 + $0x58] sm:$0xff] 0.0
    %31 = vst [vmem:[#allocation2 + $0x60] sm:$0xff] 0.0
    %32 = vst [vmem:[#allocation2 + $0x68] sm:$0xff] 0.0
    %33 = vst [vmem:[#allocation2 + $0x70] sm:$0xff] 0.0
    %34 = vst [vmem:[#allocation2 + $0x78] sm:$0xff] 0.0
  $region17: #{gr_forward.5} parent=0 // pred_fallthru
    _
  %s35 = smul.u32 0, 128
  %s36 = sshra.s32 %s35, 3
  %s37 = sand.u32 %s35, 7
  %s38 = smul.addr %s36, 4
  %s39 = scalar_lea.vmem %s1, %s38
  %v40 = vld [vmem:[%s39] sm:$0xf]
  %v41 = vld [vmem:[%s39 + $0x4] sm:$0xf]
  %v42 = vld [vmem:[%s39 + $0x8] sm:$0xf]
  %v43 = vld [vmem:[%s39 + $0xc] sm:$0xf]
  %v44 = vld [vmem:[%s39 + $0x10] sm:$0xf]
  %v45 = vld [vmem:[%s39 + $0x14] sm:$0xf]
  %v46 = vld [vmem:[%s39 + $0x18] sm:$0xf]
  %v47 = vld [vmem:[%s39 + $0x1c] sm:$0xf]
  %v48 = vld [vmem:[%s39 + $0x20] sm:$0xf]
  %v49 = vld [vmem:[%s39 + $0x24] sm:$0xf]
  %v50 = vld [vmem:[%s39 + $0x28] sm:$0xf]
  %v51 = vld [vmem:[%s39 + $0x2c] sm:$0xf]
  %v52 = vld [vmem:[%s39 + $0x30] sm:$0xf]
  %v53 = vld [vmem:[%s39 + $0x34] sm:$0xf]
  %v54 = vld [vmem:[%s39 + $0x38] sm:$0xf]
  %v55 = vld [vmem:[%s39 + $0x3c] sm:$0xf]
  %v56 = vld [vmem:[#allocation2] sm:$0xff]
  %v57 = vld [vmem:[#allocation2 + $0x8] sm:$0xff]
  %v58 = vld [vmem:[#allocation2 + $0x10] sm:$0xff]
  %v59 = vld [vmem:[#allocation2 + $0x18] sm:$0xff]
  %v60 = vld [vmem:[#allocation2 + $0x20] sm:$0xff]
  %v61 = vld [vmem:[#allocation2 + $0x28] sm:$0xff]
  %v62 = vld [vmem:[#allocation2 + $0x30] sm:$0xff]
  %v63 = vld [vmem:[#allocation2 + $0x38] sm:$0xff]
  %v64 = vld [vmem:[#allocation2 + $0x40] sm:$0xff]
  %v65 = vld [vmem:[#allocation2 + $0x48] sm:$0xff]
  %v66 = vld [vmem:[#allocation2 + $0x50] sm:$0xff]
  %v67 = vld [vmem:[#allocation2 + $0x58] sm:$0xff]
  %v68 = vld [vmem:[#allocation2 + $0x60] sm:$0xff]
  %v69 = vld [vmem:[#allocation2 + $0x68] sm:$0xff]
  %v70 = vld [vmem:[#allocation2 + $0x70] sm:$0xff]
  %v71 = vld [vmem:[#allocation2 + $0x78] sm:$0xff]
  %v72 = vld [vmem:[%s0] sm:$0xf]
  %v73 = vld [vmem:[%s0 + $0x4] sm:$0xf]
  %v74 = vld [vmem:[%s0 + $0x8] sm:$0xf]
  %v75 = vld [vmem:[%s0 + $0xc] sm:$0xf]
  %v76 = vld [vmem:[%s0 + $0x10] sm:$0xf]
  %v77 = vld [vmem:[%s0 + $0x14] sm:$0xf]
  %v78 = vld [vmem:[%s0 + $0x18] sm:$0xf]
  %v79 = vld [vmem:[%s0 + $0x1c] sm:$0xf]
  %v80 = vld [vmem:[%s0 + $0x20] sm:$0xf]
  %v81 = vld [vmem:[%s0 + $0x24] sm:$0xf]
  %v82 = vld [vmem:[%s0 + $0x28] sm:$0xf]
  %v83 = vld [vmem:[%s0 + $0x2c] sm:$0xf]
  %v84 = vld [vmem:[%s0 + $0x30] sm:$0xf]
  %v85 = vld [vmem:[%s0 + $0x34] sm:$0xf]
  %v86 = vld [vmem:[%s0 + $0x38] sm:$0xf]
  %v87 = vld [vmem:[%s0 + $0x3c] sm:$0xf]
  %v104 = vunpack.c.l.b16 %v72
  %v105 = vunpack.c.l.b16 %v73
  %v106 = vunpack.c.l.b16 %v74
  %v107 = vunpack.c.l.b16 %v75
  %v108 = vunpack.c.l.b16 %v76
  %v109 = vunpack.c.l.b16 %v77
  %v110 = vunpack.c.l.b16 %v78
  %v111 = vunpack.c.l.b16 %v79
  %v112 = vunpack.c.l.b16 %v80
  %v113 = vunpack.c.l.b16 %v81
  %v114 = vunpack.c.l.b16 %v82
  %v115 = vunpack.c.l.b16 %v83
  %v116 = vunpack.c.l.b16 %v84
  %v117 = vunpack.c.l.b16 %v85
  %v118 = vunpack.c.l.b16 %v86
  %v119 = vunpack.c.l.b16 %v87
  %v120 = vpack.c.b16 %v105, %v104
  %v121 = vpack.c.b16 %v107, %v106
  %v122 = vpack.c.b16 %v109, %v108
  %v123 = vpack.c.b16 %v111, %v110
  %v124 = vpack.c.b16 %v113, %v112
  %v125 = vpack.c.b16 %v115, %v114
  %v126 = vpack.c.b16 %v117, %v116
  %v127 = vpack.c.b16 %v119, %v118
  %v152 = vunpack.c.l.b16 %v40
  %v153 = vunpack.c.l.b16 %v41
  %v154 = vunpack.c.l.b16 %v42
  %v155 = vunpack.c.l.b16 %v43
  %v156 = vunpack.c.l.b16 %v44
  %v157 = vunpack.c.l.b16 %v45
  %v158 = vunpack.c.l.b16 %v46
  %v159 = vunpack.c.l.b16 %v47
  %v160 = vunpack.c.l.b16 %v48
  %v161 = vunpack.c.l.b16 %v49
  %v162 = vunpack.c.l.b16 %v50
  %v163 = vunpack.c.l.b16 %v51
  %v164 = vunpack.c.l.b16 %v52
  %v165 = vunpack.c.l.b16 %v53
  %v166 = vunpack.c.l.b16 %v54
  %v167 = vunpack.c.l.b16 %v55
  %v168 = vpack.c.b16 %v153, %v152
  %v169 = vpack.c.b16 %v155, %v154
  %v170 = vpack.c.b16 %v157, %v156
  %v171 = vpack.c.b16 %v159, %v158
  %v172 = vpack.c.b16 %v161, %v160
  %v173 = vpack.c.b16 %v163, %v162
  %v174 = vpack.c.b16 %v165, %v164
  %v175 = vpack.c.b16 %v167, %v166
  %184 = vmatprep.subr.bf16.mxu0 0
  %185 = vmatpush1.bf16.msra.mxu0 %v175
  %186 = vmatprep.subr.bf16.mxu0 0
  %187 = vmatpush1.bf16.msra.mxu0 %v174
  %188 = vmatprep.subr.bf16.mxu0 0
  %189 = vmatpush1.bf16.msra.mxu0 %v173
  %190 = vmatprep.subr.bf16.mxu0 0
  %191 = vmatpush1.bf16.msra.mxu0 %v172
  %192 = vmatprep.subr.bf16.mxu0 0
  %193 = vmatpush1.bf16.msra.mxu0 %v171
  %194 = vmatprep.subr.bf16.mxu0 0
  %195 = vmatpush1.bf16.msra.mxu0 %v170
  %196 = vmatprep.subr.bf16.mxu0 0
  %197 = vmatpush1.bf16.msra.mxu0 %v169
  %198 = vmatprep.subr.bf16.mxu0 0
  %199 = vmatpush1.bf16.msra.mxu0 %v168
  %200 = vmatprep.subr.bf16.mxu0 0
  %201 = vmatpush2.bf16.msra.mxu0 0
  %202 = vmatprep.subr.bf16.mxu0 0
  %203 = vmatpush2.bf16.msra.mxu0 0
  %204 = vmatprep.subr.bf16.mxu0 0
  %205 = vmatpush2.bf16.msra.mxu0 0
  %206 = vmatprep.subr.bf16.mxu0 0
  %207 = vmatpush2.bf16.msra.mxu0 0
  %208 = vmatprep.subr.bf16.mxu0 0
  %209 = vmatpush2.bf16.msra.mxu0 0
  %210 = vmatprep.subr.bf16.mxu0 0
  %211 = vmatpush2.bf16.msra.mxu0 0
  %212 = vmatprep.subr.bf16.mxu0 0
  %213 = vmatpush2.bf16.msra.mxu0 0
  %214 = vmatprep.subr.bf16.mxu0 0
  %215 = vmatpush2.bf16.msra.mxu0 0
  %216 = vmatprep.mubr.bf16.mxu0 0
  %217 = vmatmul.mubr.bf16.gmra.mxu0 %v120
  %v218 = vpop.f32.mrf.mxu0
  %v219 = vadd.f32 0.0, %v218
  %v220 = vpop.f32.mrf.mxu0
  %v221 = vpop.f32.mrf.mxu0
  %v222 = vadd.f32 0.0, %v221
  %v223 = vpop.f32.mrf.mxu0
  %224 = vmatprep.mubr.bf16.mxu0 0
  %225 = vmatmul.mubr.bf16.gmra.mxu0 %v121
  %v226 = vpop.f32.mrf.mxu0
  %v227 = vadd.f32 0.0, %v226
  %v228 = vpop.f32.mrf.mxu0
  %v229 = vpop.f32.mrf.mxu0
  %v230 = vadd.f32 0.0, %v229
  %v231 = vpop.f32.mrf.mxu0
  %232 = vmatprep.mubr.bf16.mxu0 0
  %233 = vmatmul.mubr.bf16.gmra.mxu0 %v122
  %v234 = vpop.f32.mrf.mxu0
  %v235 = vadd.f32 0.0, %v234
  %v236 = vpop.f32.mrf.mxu0
  %v237 = vpop.f32.mrf.mxu0
  %v238 = vadd.f32 0.0, %v237
  %v239 = vpop.f32.mrf.mxu0
  %240 = vmatprep.mubr.bf16.mxu0 0
  %241 = vmatmul.mubr.bf16.gmra.mxu0 %v123
  %v242 = vpop.f32.mrf.mxu0
  %v243 = vadd.f32 0.0, %v242
  %v244 = vpop.f32.mrf.mxu0
  %v245 = vpop.f32.mrf.mxu0
  %v246 = vadd.f32 0.0, %v245
  %v247 = vpop.f32.mrf.mxu0
  %248 = vmatprep.mubr.bf16.mxu0 0
  %249 = vmatmul.mubr.bf16.gmra.mxu0 %v124
  %v250 = vpop.f32.mrf.mxu0
  %v251 = vadd.f32 0.0, %v250
  %v252 = vpop.f32.mrf.mxu0
  %v253 = vpop.f32.mrf.mxu0
  %v254 = vadd.f32 0.0, %v253
  %v255 = vpop.f32.mrf.mxu0
  %256 = vmatprep.mubr.bf16.mxu0 0
  %257 = vmatmul.mubr.bf16.gmra.mxu0 %v125
  %v258 = vpop.f32.mrf.mxu0
  %v259 = vadd.f32 0.0, %v258
  %v260 = vpop.f32.mrf.mxu0
  %v261 = vpop.f32.mrf.mxu0
  %v262 = vadd.f32 0.0, %v261
  %v263 = vpop.f32.mrf.mxu0
  %264 = vmatprep.mubr.bf16.mxu0 0
  %265 = vmatmul.mubr.bf16.gmra.mxu0 %v126
  %v266 = vpop.f32.mrf.mxu0
  %v267 = vadd.f32 0.0, %v266
  %v268 = vpop.f32.mrf.mxu0
  %v269 = vpop.f32.mrf.mxu0
  %v270 = vadd.f32 0.0, %v269
  %v271 = vpop.f32.mrf.mxu0
  %272 = vmatprep.mubr.bf16.mxu0 0
  %273 = vmatmul.mubr.bf16.gmra.mxu0 %v127
  %v274 = vpop.f32.mrf.mxu0
  %v275 = vadd.f32 0.0, %v274
  %v276 = vpop.f32.mrf.mxu0
  %v277 = vpop.f32.mrf.mxu0
  %v278 = vadd.f32 0.0, %v277
  %v279 = vpop.f32.mrf.mxu0
  %280 = vdwg.mxu0
  %v281 = vadd.f32 %v56, %v219
  %v282 = vadd.f32 %v57, %v222
  %v283 = vadd.f32 %v58, %v227
  %v284 = vadd.f32 %v59, %v230
  %v285 = vadd.f32 %v60, %v235
  %v286 = vadd.f32 %v61, %v238
  %v287 = vadd.f32 %v62, %v243
  %v288 = vadd.f32 %v63, %v246
  %v289 = vadd.f32 %v64, %v251
  %v290 = vadd.f32 %v65, %v254
  %v291 = vadd.f32 %v66, %v259
  %v292 = vadd.f32 %v67, %v262
  %v293 = vadd.f32 %v68, %v267
  %v294 = vadd.f32 %v69, %v270
  %v295 = vadd.f32 %v70, %v275
  %v296 = vadd.f32 %v71, %v278
  %297 = vst [vmem:[#allocation2] sm:$0xff] %v281
  %298 = vst [vmem:[#allocation2 + $0x8] sm:$0xff] %v282
  %299 = vst [vmem:[#allocation2 + $0x10] sm:$0xff] %v283
  %300 = vst [vmem:[#allocation2 + $0x18] sm:$0xff] %v284
  %301 = vst [vmem:[#allocation2 + $0x20] sm:$0xff] %v285
  %302 = vst [vmem:[#allocation2 + $0x28] sm:$0xff] %v286
  %303 = vst [vmem:[#allocation2 + $0x30] sm:$0xff] %v287
  %304 = vst [vmem:[#allocation2 + $0x38] sm:$0xff] %v288
  %305 = vst [vmem:[#allocation2 + $0x40] sm:$0xff] %v289
  %306 = vst [vmem:[#allocation2 + $0x48] sm:$0xff] %v290
  %307 = vst [vmem:[#allocation2 + $0x50] sm:$0xff] %v291
  %308 = vst [vmem:[#allocation2 + $0x58] sm:$0xff] %v292
  %309 = vst [vmem:[#allocation2 + $0x60] sm:$0xff] %v293
  %310 = vst [vmem:[#allocation2 + $0x68] sm:$0xff] %v294
  %311 = vst [vmem:[#allocation2 + $0x70] sm:$0xff] %v295
  %312 = vst [vmem:[#allocation2 + $0x78] sm:$0xff] %v296
  // Predicated region
  $region18: #{gr_forward.5} parent=0 // pred_check
    %p313 = pneg %p15
  $region19: #{gr_forward.5} parent=0 // pred_check_branch
    %315 = sbr.rel (%p313) target = $region21
  $region20: #{gr_forward.5} parent=0 // pred_region
    %v316 = vld [vmem:[#allocation2] sm:$0xff]
    %v317 = vld [vmem:[#allocation2 + $0x8] sm:$0xff]
    %v318 = vld [vmem:[#allocation2 + $0x10] sm:$0xff]
    %v319 = vld [vmem:[#allocation2 + $0x18] sm:$0xff]
    %v320 = vld [vmem:[#allocation2 + $0x20] sm:$0xff]
    %v321 = vld [vmem:[#allocation2 + $0x28] sm:$0xff]
    %v322 = vld [vmem:[#allocation2 + $0x30] sm:$0xff]
    %v323 = vld [vmem:[#allocation2 + $0x38] sm:$0xff]
    %v324 = vld [vmem:[#allocation2 + $0x40] sm:$0xff]
    %v325 = vld [vmem:[#allocation2 + $0x48] sm:$0xff]
    %v326 = vld [vmem:[#allocation2 + $0x50] sm:$0xff]
    %v327 = vld [vmem:[#allocation2 + $0x58] sm:$0xff]
    %v328 = vld [vmem:[#allocation2 + $0x60] sm:$0xff]
    %v329 = vld [vmem:[#allocation2 + $0x68] sm:$0xff]
    %v330 = vld [vmem:[#allocation2 + $0x70] sm:$0xff]
    %v331 = vld [vmem:[#allocation2 + $0x78] sm:$0xff]
    %v332 = vld [vmem:[%s2] sm:$0x1]
    %v334 = vlaneseq
    %v335 = vshrl.u32 %v334, 7
    %v336 = vsub.s32 0, %v335
    %v337 = vrot.slane %v332, %v336
    %v339 = vadd.f32 %v316, %v337
    %v340 = vadd.f32 %v317, %v337
    %v341 = vadd.f32 %v318, %v337
    %v342 = vadd.f32 %v319, %v337
    %v343 = vadd.f32 %v320, %v337
    %v344 = vadd.f32 %v321, %v337
    %v345 = vadd.f32 %v322, %v337
    %v346 = vadd.f32 %v323, %v337
    %v347 = vadd.f32 %v324, %v337
    %v348 = vadd.f32 %v325, %v337
    %v349 = vadd.f32 %v326, %v337
    %v350 = vadd.f32 %v327, %v337
    %v351 = vadd.f32 %v328, %v337
    %v352 = vadd.f32 %v329, %v337
    %v353 = vadd.f32 %v330, %v337
    %v354 = vadd.f32 %v331, %v337
    %v355 = vpack.c.bf16 %v340, %v339
    %v356 = vpack.c.bf16 %v342, %v341
    %v357 = vpack.c.bf16 %v344, %v343
    %v358 = vpack.c.bf16 %v346, %v345
    %v359 = vpack.c.bf16 %v348, %v347
    %v360 = vpack.c.bf16 %v350, %v349
    %v361 = vpack.c.bf16 %v352, %v351
    %v362 = vpack.c.bf16 %v354, %v353
    %v371 = vunpack.c.l.b16 %v355
    %v372 = vunpack.c.h.b16 %v355
    %v373 = vunpack.c.l.b16 %v356
    %v374 = vunpack.c.h.b16 %v356
    %v375 = vunpack.c.l.b16 %v357
    %v376 = vunpack.c.h.b16 %v357
    %v377 = vunpack.c.l.b16 %v358
    %v378 = vunpack.c.h.b16 %v358
    %v379 = vunpack.c.l.b16 %v359
    %v380 = vunpack.c.h.b16 %v359
    %v381 = vunpack.c.l.b16 %v360
    %v382 = vunpack.c.h.b16 %v360
    %v383 = vunpack.c.l.b16 %v361
    %v384 = vunpack.c.h.b16 %v361
    %v385 = vunpack.c.l.b16 %v362
    %v386 = vunpack.c.h.b16 %v362
    %v387 = vpack.c.b16 %v371, %v371
    %v388 = vpack.c.b16 %v372, %v372
    %v389 = vpack.c.b16 %v373, %v373
    %v390 = vpack.c.b16 %v374, %v374
    %v391 = vpack.c.b16 %v375, %v375
    %v392 = vpack.c.b16 %v376, %v376
    %v393 = vpack.c.b16 %v377, %v377
    %v394 = vpack.c.b16 %v378, %v378
    %v395 = vpack.c.b16 %v379, %v379
    %v396 = vpack.c.b16 %v380, %v380
    %v397 = vpack.c.b16 %v381, %v381
    %v398 = vpack.c.b16 %v382, %v382
    %v399 = vpack.c.b16 %v383, %v383
    %v400 = vpack.c.b16 %v384, %v384
    %v401 = vpack.c.b16 %v385, %v385
    %v402 = vpack.c.b16 %v386, %v386
    %419 = vst [vmem:[%s3] sm:$0xf] %v387
    %420 = vst [vmem:[%s3 + $0x4] sm:$0xf] %v388
    %421 = vst [vmem:[%s3 + $0x8] sm:$0xf] %v389
    %422 = vst [vmem:[%s3 + $0xc] sm:$0xf] %v390
    %423 = vst [vmem:[%s3 + $0x10] sm:$0xf] %v391
    %424 = vst [vmem:[%s3 + $0x14] sm:$0xf] %v392
    %425 = vst [vmem:[%s3 + $0x18] sm:$0xf] %v393
    %426 = vst [vmem:[%s3 + $0x1c] sm:$0xf] %v394
    %427 = vst [vmem:[%s3 + $0x20] sm:$0xf] %v395
    %428 = vst [vmem:[%s3 + $0x24] sm:$0xf] %v396
    %429 = vst [vmem:[%s3 + $0x28] sm:$0xf] %v397
    %430 = vst [vmem:[%s3 + $0x2c] sm:$0xf] %v398
    %431 = vst [vmem:[%s3 + $0x30] sm:$0xf] %v399
    %432 = vst [vmem:[%s3 + $0x34] sm:$0xf] %v400
    %433 = vst [vmem:[%s3 + $0x38] sm:$0xf] %v401
    %434 = vst [vmem:[%s3 + $0x3c] sm:$0xf] %v402
  $region21: #{gr_forward.5} parent=0 // pred_fallthru
    _
  // Predicated region
  $region22: #{gr_forward.5} parent=0 // pred_check
    _
  $region23: #{gr_forward.5} parent=0 // pred_check_branch
    %436 = sbr.rel (0) target = $region25
  $region24: #{gr_forward.5} parent=0 // pred_region
    _
  $region25: #{gr_forward.5} parent=0 // pred_fallthru
    _
  // Predicated region
  $region26: #{gr_forward.5} parent=0 // pred_check
    _
  $region27: #{gr_forward.5} parent=0 // pred_check_branch
    %438 = sbr.rel (0) target = $region29
  $region28: #{gr_forward.5} parent=0 // pred_region
    _
  $region29: #{gr_forward.5} parent=0 // pred_fallthru
    _

// kernel: gr_forward.7
$region0: #{gr_forward.7}
  #allocation0 [shape = 'u32[]', space=smem, size = 0x4, offset = 0x4, fixed_abs, tag = 'smem constant byte address 0x4 - core index']
  #allocation1 [shape = 'u32[144,128]{1,0:T(1,128)}', space=vmem, size = 0x12000, scoped, tag = 'internal scratch']
  #allocation2 [shape = 'f32[128,128]{1,0:T(8,128)}', space=vmem, size = 0x10000, scoped, tag = 'scratch operand']
  %s0 = inlined_call_operand.vmem [shape: bf16[128,128], index: 0, kind: input, shape index: {}]
  %s1 = inlined_call_operand.vmem [shape: bf16[128,128], index: 1, kind: input, shape index: {}]
  %s2 = inlined_call_operand.vmem [shape: f32[1,128], index: 2, kind: input, shape index: {}]
  %s3 = inlined_call_operand.vmem [shape: f32[128,128], index: 3, kind: output, shape index: {}]
  %s4 = sld [smem:[#allocation0]]
  $region30: #{gr_forward.7} parent=0
    _
  %s6 = ssub.s32 1, %s4
  %s7 = scalar_select 0, %s6, %s4
  // Predicated region
  $region2: #{gr_forward.7} parent=0 // pred_check
    _
  $region3: #{gr_forward.7} parent=0 // pred_check_branch
    %9 = sbr.rel (0) target = $region5
  $region4: #{gr_forward.7} parent=0 // pred_region
    _
  $region5: #{gr_forward.7} parent=0 // pred_fallthru
    _
  // Predicated region
  $region6: #{gr_forward.7} parent=0 // pred_check
    _
  $region7: #{gr_forward.7} parent=0 // pred_check_branch
    %11 = sbr.rel (0) target = $region9
  $region8: #{gr_forward.7} parent=0 // pred_region
    _
  $region9: #{gr_forward.7} parent=0 // pred_fallthru
    _
  // Predicated region
  $region10: #{gr_forward.7} parent=0 // pred_check
    _
  $region11: #{gr_forward.7} parent=0 // pred_check_branch
    %13 = sbr.rel (0) target = $region13
  $region12: #{gr_forward.7} parent=0 // pred_region
    _
  $region13: #{gr_forward.7} parent=0 // pred_fallthru
    _
  %p15 = scmp.eq.s32.totalorder 0, 0
  // Predicated region
  $region14: #{gr_forward.7} parent=0 // pred_check
    %p16 = pneg %p15
  $region15: #{gr_forward.7} parent=0 // pred_check_branch
    %18 = sbr.rel (%p16) target = $region17
  $region16: #{gr_forward.7} parent=0 // pred_region
    %19 = vst [vmem:[#allocation2] sm:$0xff] 0.0
    %20 = vst [vmem:[#allocation2 + $0x8] sm:$0xff] 0.0
    %21 = vst [vmem:[#allocation2 + $0x10] sm:$0xff] 0.0
    %22 = vst [vmem:[#allocation2 + $0x18] sm:$0xff] 0.0
    %23 = vst [vmem:[#allocation2 + $0x20] sm:$0xff] 0.0
    %24 = vst [vmem:[#allocation2 + $0x28] sm:$0xff] 0.0
    %25 = vst [vmem:[#allocation2 + $0x30] sm:$0xff] 0.0
    %26 = vst [vmem:[#allocation2 + $0x38] sm:$0xff] 0.0
    %27 = vst [vmem:[#allocation2 + $0x40] sm:$0xff] 0.0
    %28 = vst [vmem:[#allocation2 + $0x48] sm:$0xff] 0.0
    %29 = vst [vmem:[#allocation2 + $0x50] sm:$0xff] 0.0
    %30 = vst [vmem:[#allocation2 + $0x58] sm:$0xff] 0.0
    %31 = vst [vmem:[#allocation2 + $0x60] sm:$0xff] 0.0
    %32 = vst [vmem:[#allocation2 + $0x68] sm:$0xff] 0.0
    %33 = vst [vmem:[#allocation2 + $0x70] sm:$0xff] 0.0
    %34 = vst [vmem:[#allocation2 + $0x78] sm:$0xff] 0.0
  $region17: #{gr_forward.7} parent=0 // pred_fallthru
    _
  %s35 = smul.u32 0, 128
  %s36 = sshra.s32 %s35, 3
  %s37 = sand.u32 %s35, 7
  %s38 = smul.addr %s36, 4
  %s39 = scalar_lea.vmem %s1, %s38
  %v40 = vld [vmem:[%s39] sm:$0xf]
  %v41 = vld [vmem:[%s39 + $0x4] sm:$0xf]
  %v42 = vld [vmem:[%s39 + $0x8] sm:$0xf]
  %v43 = vld [vmem:[%s39 + $0xc] sm:$0xf]
  %v44 = vld [vmem:[%s39 + $0x10] sm:$0xf]
  %v45 = vld [vmem:[%s39 + $0x14] sm:$0xf]
  %v46 = vld [vmem:[%s39 + $0x18] sm:$0xf]
  %v47 = vld [vmem:[%s39 + $0x1c] sm:$0xf]
  %v48 = vld [vmem:[%s39 + $0x20] sm:$0xf]
  %v49 = vld [vmem:[%s39 + $0x24] sm:$0xf]
  %v50 = vld [vmem:[%s39 + $0x28] sm:$0xf]
  %v51 = vld [vmem:[%s39 + $0x2c] sm:$0xf]
  %v52 = vld [vmem:[%s39 + $0x30] sm:$0xf]
  %v53 = vld [vmem:[%s39 + $0x34] sm:$0xf]
  %v54 = vld [vmem:[%s39 + $0x38] sm:$0xf]
  %v55 = vld [vmem:[%s39 + $0x3c] sm:$0xf]
  %v56 = vld [vmem:[#allocation2] sm:$0xff]
  %v57 = vld [vmem:[#allocation2 + $0x8] sm:$0xff]
  %v58 = vld [vmem:[#allocation2 + $0x10] sm:$0xff]
  %v59 = vld [vmem:[#allocation2 + $0x18] sm:$0xff]
  %v60 = vld [vmem:[#allocation2 + $0x20] sm:$0xff]
  %v61 = vld [vmem:[#allocation2 + $0x28] sm:$0xff]
  %v62 = vld [vmem:[#allocation2 + $0x30] sm:$0xff]
  %v63 = vld [vmem:[#allocation2 + $0x38] sm:$0xff]
  %v64 = vld [vmem:[#allocation2 + $0x40] sm:$0xff]
  %v65 = vld [vmem:[#allocation2 + $0x48] sm:$0xff]
  %v66 = vld [vmem:[#allocation2 + $0x50] sm:$0xff]
  %v67 = vld [vmem:[#allocation2 + $0x58] sm:$0xff]
  %v68 = vld [vmem:[#allocation2 + $0x60] sm:$0xff]
  %v69 = vld [vmem:[#allocation2 + $0x68] sm:$0xff]
  %v70 = vld [vmem:[#allocation2 + $0x70] sm:$0xff]
  %v71 = vld [vmem:[#allocation2 + $0x78] sm:$0xff]
  %v72 = vld [vmem:[%s0] sm:$0xf]
  %v73 = vld [vmem:[%s0 + $0x4] sm:$0xf]
  %v74 = vld [vmem:[%s0 + $0x8] sm:$0xf]
  %v75 = vld [vmem:[%s0 + $0xc] sm:$0xf]
  %v76 = vld [vmem:[%s0 + $0x10] sm:$0xf]
  %v77 = vld [vmem:[%s0 + $0x14] sm:$0xf]
  %v78 = vld [vmem:[%s0 + $0x18] sm:$0xf]
  %v79 = vld [vmem:[%s0 + $0x1c] sm:$0xf]
  %v80 = vld [vmem:[%s0 + $0x20] sm:$0xf]
  %v81 = vld [vmem:[%s0 + $0x24] sm:$0xf]
  %v82 = vld [vmem:[%s0 + $0x28] sm:$0xf]
  %v83 = vld [vmem:[%s0 + $0x2c] sm:$0xf]
  %v84 = vld [vmem:[%s0 + $0x30] sm:$0xf]
  %v85 = vld [vmem:[%s0 + $0x34] sm:$0xf]
  %v86 = vld [vmem:[%s0 + $0x38] sm:$0xf]
  %v87 = vld [vmem:[%s0 + $0x3c] sm:$0xf]
  %v104 = vunpack.c.l.b16 %v72
  %v105 = vunpack.c.l.b16 %v73
  %v106 = vunpack.c.l.b16 %v74
  %v107 = vunpack.c.l.b16 %v75
  %v108 = vunpack.c.l.b16 %v76
  %v109 = vunpack.c.l.b16 %v77
  %v110 = vunpack.c.l.b16 %v78
  %v111 = vunpack.c.l.b16 %v79
  %v112 = vunpack.c.l.b16 %v80
  %v113 = vunpack.c.l.b16 %v81
  %v114 = vunpack.c.l.b16 %v82
  %v115 = vunpack.c.l.b16 %v83
  %v116 = vunpack.c.l.b16 %v84
  %v117 = vunpack.c.l.b16 %v85
  %v118 = vunpack.c.l.b16 %v86
  %v119 = vunpack.c.l.b16 %v87
  %v120 = vpack.c.b16 %v105, %v104
  %v121 = vpack.c.b16 %v107, %v106
  %v122 = vpack.c.b16 %v109, %v108
  %v123 = vpack.c.b16 %v111, %v110
  %v124 = vpack.c.b16 %v113, %v112
  %v125 = vpack.c.b16 %v115, %v114
  %v126 = vpack.c.b16 %v117, %v116
  %v127 = vpack.c.b16 %v119, %v118
  %v152 = vunpack.c.l.b16 %v40
  %v153 = vunpack.c.l.b16 %v41
  %v154 = vunpack.c.l.b16 %v42
  %v155 = vunpack.c.l.b16 %v43
  %v156 = vunpack.c.l.b16 %v44
  %v157 = vunpack.c.l.b16 %v45
  %v158 = vunpack.c.l.b16 %v46
  %v159 = vunpack.c.l.b16 %v47
  %v160 = vunpack.c.l.b16 %v48
  %v161 = vunpack.c.l.b16 %v49
  %v162 = vunpack.c.l.b16 %v50
  %v163 = vunpack.c.l.b16 %v51
  %v164 = vunpack.c.l.b16 %v52
  %v165 = vunpack.c.l.b16 %v53
  %v166 = vunpack.c.l.b16 %v54
  %v167 = vunpack.c.l.b16 %v55
  %v168 = vpack.c.b16 %v153, %v152
  %v169 = vpack.c.b16 %v155, %v154
  %v170 = vpack.c.b16 %v157, %v156
  %v171 = vpack.c.b16 %v159, %v158
  %v172 = vpack.c.b16 %v161, %v160
  %v173 = vpack.c.b16 %v163, %v162
  %v174 = vpack.c.b16 %v165, %v164
  %v175 = vpack.c.b16 %v167, %v166
  %184 = vmatprep.subr.bf16.mxu0 0
  %185 = vmatpush1.bf16.msra.mxu0 %v175
  %186 = vmatprep.subr.bf16.mxu0 0
  %187 = vmatpush1.bf16.msra.mxu0 %v174
  %188 = vmatprep.subr.bf16.mxu0 0
  %189 = vmatpush1.bf16.msra.mxu0 %v173
  %190 = vmatprep.subr.bf16.mxu0 0
  %191 = vmatpush1.bf16.msra.mxu0 %v172
  %192 = vmatprep.subr.bf16.mxu0 0
  %193 = vmatpush1.bf16.msra.mxu0 %v171
  %194 = vmatprep.subr.bf16.mxu0 0
  %195 = vmatpush1.bf16.msra.mxu0 %v170
  %196 = vmatprep.subr.bf16.mxu0 0
  %197 = vmatpush1.bf16.msra.mxu0 %v169
  %198 = vmatprep.subr.bf16.mxu0 0
  %199 = vmatpush1.bf16.msra.mxu0 %v168
  %200 = vmatprep.subr.bf16.mxu0 0
  %201 = vmatpush2.bf16.msra.mxu0 0
  %202 = vmatprep.subr.bf16.mxu0 0
  %203 = vmatpush2.bf16.msra.mxu0 0
  %204 = vmatprep.subr.bf16.mxu0 0
  %205 = vmatpush2.bf16.msra.mxu0 0
  %206 = vmatprep.subr.bf16.mxu0 0
  %207 = vmatpush2.bf16.msra.mxu0 0
  %208 = vmatprep.subr.bf16.mxu0 0
  %209 = vmatpush2.bf16.msra.mxu0 0
  %210 = vmatprep.subr.bf16.mxu0 0
  %211 = vmatpush2.bf16.msra.mxu0 0
  %212 = vmatprep.subr.bf16.mxu0 0
  %213 = vmatpush2.bf16.msra.mxu0 0
  %214 = vmatprep.subr.bf16.mxu0 0
  %215 = vmatpush2.bf16.msra.mxu0 0
  %216 = vmatprep.mubr.bf16.mxu0 0
  %217 = vmatmul.mubr.bf16.gmra.mxu0 %v120
  %v218 = vpop.f32.mrf.mxu0
  %v219 = vadd.f32 0.0, %v218
  %v220 = vpop.f32.mrf.mxu0
  %v221 = vpop.f32.mrf.mxu0
  %v222 = vadd.f32 0.0, %v221
  %v223 = vpop.f32.mrf.mxu0
  %224 = vmatprep.mubr.bf16.mxu0 0
  %225 = vmatmul.mubr.bf16.gmra.mxu0 %v121
  %v226 = vpop.f32.mrf.mxu0
  %v227 = vadd.f32 0.0, %v226
  %v228 = vpop.f32.mrf.mxu0
  %v229 = vpop.f32.mrf.mxu0
  %v230 = vadd.f32 0.0, %v229
  %v231 = vpop.f32.mrf.mxu0
  %232 = vmatprep.mubr.bf16.mxu0 0
  %233 = vmatmul.mubr.bf16.gmra.mxu0 %v122
  %v234 = vpop.f32.mrf.mxu0
  %v235 = vadd.f32 0.0, %v234
  %v236 = vpop.f32.mrf.mxu0
  %v237 = vpop.f32.mrf.mxu0
  %v238 = vadd.f32 0.0, %v237
  %v239 = vpop.f32.mrf.mxu0
  %240 = vmatprep.mubr.bf16.mxu0 0
  %241 = vmatmul.mubr.bf16.gmra.mxu0 %v123
  %v242 = vpop.f32.mrf.mxu0
  %v243 = vadd.f32 0.0, %v242
  %v244 = vpop.f32.mrf.mxu0
  %v245 = vpop.f32.mrf.mxu0
  %v246 = vadd.f32 0.0, %v245
  %v247 = vpop.f32.mrf.mxu0
  %248 = vmatprep.mubr.bf16.mxu0 0
  %249 = vmatmul.mubr.bf16.gmra.mxu0 %v124
  %v250 = vpop.f32.mrf.mxu0
  %v251 = vadd.f32 0.0, %v250
  %v252 = vpop.f32.mrf.mxu0
  %v253 = vpop.f32.mrf.mxu0
  %v254 = vadd.f32 0.0, %v253
  %v255 = vpop.f32.mrf.mxu0
  %256 = vmatprep.mubr.bf16.mxu0 0
  %257 = vmatmul.mubr.bf16.gmra.mxu0 %v125
  %v258 = vpop.f32.mrf.mxu0
  %v259 = vadd.f32 0.0, %v258
  %v260 = vpop.f32.mrf.mxu0
  %v261 = vpop.f32.mrf.mxu0
  %v262 = vadd.f32 0.0, %v261
  %v263 = vpop.f32.mrf.mxu0
  %264 = vmatprep.mubr.bf16.mxu0 0
  %265 = vmatmul.mubr.bf16.gmra.mxu0 %v126
  %v266 = vpop.f32.mrf.mxu0
  %v267 = vadd.f32 0.0, %v266
  %v268 = vpop.f32.mrf.mxu0
  %v269 = vpop.f32.mrf.mxu0
  %v270 = vadd.f32 0.0, %v269
  %v271 = vpop.f32.mrf.mxu0
  %272 = vmatprep.mubr.bf16.mxu0 0
  %273 = vmatmul.mubr.bf16.gmra.mxu0 %v127
  %v274 = vpop.f32.mrf.mxu0
  %v275 = vadd.f32 0.0, %v274
  %v276 = vpop.f32.mrf.mxu0
  %v277 = vpop.f32.mrf.mxu0
  %v278 = vadd.f32 0.0, %v277
  %v279 = vpop.f32.mrf.mxu0
  %280 = vdwg.mxu0
  %v281 = vadd.f32 %v56, %v219
  %v282 = vadd.f32 %v57, %v222
  %v283 = vadd.f32 %v58, %v227
  %v284 = vadd.f32 %v59, %v230
  %v285 = vadd.f32 %v60, %v235
  %v286 = vadd.f32 %v61, %v238
  %v287 = vadd.f32 %v62, %v243
  %v288 = vadd.f32 %v63, %v246
  %v289 = vadd.f32 %v64, %v251
  %v290 = vadd.f32 %v65, %v254
  %v291 = vadd.f32 %v66, %v259
  %v292 = vadd.f32 %v67, %v262
  %v293 = vadd.f32 %v68, %v267
  %v294 = vadd.f32 %v69, %v270
  %v295 = vadd.f32 %v70, %v275
  %v296 = vadd.f32 %v71, %v278
  %297 = vst [vmem:[#allocation2] sm:$0xff] %v281
  %298 = vst [vmem:[#allocation2 + $0x8] sm:$0xff] %v282
  %299 = vst [vmem:[#allocation2 + $0x10] sm:$0xff] %v283
  %300 = vst [vmem:[#allocation2 + $0x18] sm:$0xff] %v284
  %301 = vst [vmem:[#allocation2 + $0x20] sm:$0xff] %v285
  %302 = vst [vmem:[#allocation2 + $0x28] sm:$0xff] %v286
  %303 = vst [vmem:[#allocation2 + $0x30] sm:$0xff] %v287
  %304 = vst [vmem:[#allocation2 + $0x38] sm:$0xff] %v288
  %305 = vst [vmem:[#allocation2 + $0x40] sm:$0xff] %v289
  %306 = vst [vmem:[#allocation2 + $0x48] sm:$0xff] %v290
  %307 = vst [vmem:[#allocation2 + $0x50] sm:$0xff] %v291
  %308 = vst [vmem:[#allocation2 + $0x58] sm:$0xff] %v292
  %309 = vst [vmem:[#allocation2 + $0x60] sm:$0xff] %v293
  %310 = vst [vmem:[#allocation2 + $0x68] sm:$0xff] %v294
  %311 = vst [vmem:[#allocation2 + $0x70] sm:$0xff] %v295
  %312 = vst [vmem:[#allocation2 + $0x78] sm:$0xff] %v296
  // Predicated region
  $region18: #{gr_forward.7} parent=0 // pred_check
    %p313 = pneg %p15
  $region19: #{gr_forward.7} parent=0 // pred_check_branch
    %315 = sbr.rel (%p313) target = $region21
  $region20: #{gr_forward.7} parent=0 // pred_region
    %v316 = vld [vmem:[#allocation2] sm:$0xff]
    %v317 = vld [vmem:[#allocation2 + $0x8] sm:$0xff]
    %v318 = vld [vmem:[#allocation2 + $0x10] sm:$0xff]
    %v319 = vld [vmem:[#allocation2 + $0x18] sm:$0xff]
    %v320 = vld [vmem:[#allocation2 + $0x20] sm:$0xff]
    %v321 = vld [vmem:[#allocation2 + $0x28] sm:$0xff]
    %v322 = vld [vmem:[#allocation2 + $0x30] sm:$0xff]
    %v323 = vld [vmem:[#allocation2 + $0x38] sm:$0xff]
    %v324 = vld [vmem:[#allocation2 + $0x40] sm:$0xff]
    %v325 = vld [vmem:[#allocation2 + $0x48] sm:$0xff]
    %v326 = vld [vmem:[#allocation2 + $0x50] sm:$0xff]
    %v327 = vld [vmem:[#allocation2 + $0x58] sm:$0xff]
    %v328 = vld [vmem:[#allocation2 + $0x60] sm:$0xff]
    %v329 = vld [vmem:[#allocation2 + $0x68] sm:$0xff]
    %v330 = vld [vmem:[#allocation2 + $0x70] sm:$0xff]
    %v331 = vld [vmem:[#allocation2 + $0x78] sm:$0xff]
    %v332 = vld [vmem:[%s2] sm:$0x1]
    %v334 = vlaneseq
    %v335 = vshrl.u32 %v334, 7
    %v336 = vsub.s32 0, %v335
    %v337 = vrot.slane %v332, %v336
    %v339 = vadd.f32 %v316, %v337
    %v340 = vadd.f32 %v317, %v337
    %v341 = vadd.f32 %v318, %v337
    %v342 = vadd.f32 %v319, %v337
    %v343 = vadd.f32 %v320, %v337
    %v344 = vadd.f32 %v321, %v337
    %v345 = vadd.f32 %v322, %v337
    %v346 = vadd.f32 %v323, %v337
    %v347 = vadd.f32 %v324, %v337
    %v348 = vadd.f32 %v325, %v337
    %v349 = vadd.f32 %v326, %v337
    %v350 = vadd.f32 %v327, %v337
    %v351 = vadd.f32 %v328, %v337
    %v352 = vadd.f32 %v329, %v337
    %v353 = vadd.f32 %v330, %v337
    %v354 = vadd.f32 %v331, %v337
    %355 = vst [vmem:[%s3] sm:$0xff] %v339
    %356 = vst [vmem:[%s3 + $0x8] sm:$0xff] %v340
    %357 = vst [vmem:[%s3 + $0x10] sm:$0xff] %v341
    %358 = vst [vmem:[%s3 + $0x18] sm:$0xff] %v342
    %359 = vst [vmem:[%s3 + $0x20] sm:$0xff] %v343
    %360 = vst [vmem:[%s3 + $0x28] sm:$0xff] %v344
    %361 = vst [vmem:[%s3 + $0x30] sm:$0xff] %v345
    %362 = vst [vmem:[%s3 + $0x38] sm:$0xff] %v346
    %363 = vst [vmem:[%s3 + $0x40] sm:$0xff] %v347
    %364 = vst [vmem:[%s3 + $0x48] sm:$0xff] %v348
    %365 = vst [vmem:[%s3 + $0x50] sm:$0xff] %v349
    %366 = vst [vmem:[%s3 + $0x58] sm:$0xff] %v350
    %367 = vst [vmem:[%s3 + $0x60] sm:$0xff] %v351
    %368 = vst [vmem:[%s3 + $0x68] sm:$0xff] %v352
    %369 = vst [vmem:[%s3 + $0x70] sm:$0xff] %v353
    %370 = vst [vmem:[%s3 + $0x78] sm:$0xff] %v354
  $region21: #{gr_forward.7} parent=0 // pred_fallthru
    _
  // Predicated region
  $region22: #{gr_forward.7} parent=0 // pred_check
    _
  $region23: #{gr_forward.7} parent=0 // pred_check_branch
    %372 = sbr.rel (0) target = $region25
  $region24: #{gr_forward.7} parent=0 // pred_region
    _
  $region25: #{gr_forward.7} parent=0 // pred_fallthru
    _
  // Predicated region
  $region26: #{gr_forward.7} parent=0 // pred_check
    _
  $region27: #{gr_forward.7} parent=0 // pred_check_branch
    %374 = sbr.rel (0) target = $region29
  $region28: #{gr_forward.7} parent=0 // pred_region
    _
  $region29: #{gr_forward.7} parent=0 // pred_fallthru
    _

</llo_original>
